<compile_context>
chip_gen: v6e
topology: v6e:2x2x1
jax: 0.10.0
libtpu: 0.0.40
codegen_flags: <defaults>
</compile_context>

<pallas_src>
import functools

import jax
import jax.numpy as jnp
from jax import lax
from jax.experimental import pallas as pl
from jax.experimental.pallas import tpu as pltpu

P_NORM = 2                 # matches the `p_norm` constructor argument (L2 here)
_EPS = 1e-12               # F.normalize clamp_min eps
_LANE = 128
_SUBLANE = 8

_MAX_TILE_ROWS = 512                        # soft cap on batch rows per grid step
_GATHER_SCRATCH_BUDGET = 16 * 1024 * 1024   # 2 slots x (h,t) double-buffered scratch
_VMEM_LIMIT = 48 * 1024 * 1024              # fits v5e/v6e (128 MiB) and v7x (64 MiB)

# Fully-resident path thresholds (one-hot MXU gather stays cheap below these).
_RESIDENT_MAX_ROWS = 2048
_RESIDENT_MAX_TABLE_BYTES = 8 * 1024 * 1024


def _round_up(x, m):
    return (x + m - 1) // m * m


def _normalize(x, p):
    # F.normalize(x, p, -1): x / max(||x||_p, eps)
    if p == 2:
        s = jnp.sum(x * x, axis=-1, keepdims=True)
        # max(sqrt(s), eps) == sqrt(max(s, eps^2)) for s >= 0 -> rsqrt on EUP
        return x * lax.rsqrt(jnp.maximum(s, _EPS * _EPS))
    elif p == 1:
        n = jnp.sum(jnp.abs(x), axis=-1, keepdims=True)
        return x / jnp.maximum(n, _EPS)
    else:
        n = jnp.power(
            jnp.sum(jnp.power(jnp.abs(x), p), axis=-1, keepdims=True), 1.0 / p)
        return x / jnp.maximum(n, _EPS)


def _score_lane_dense(res, p):
    """-||res||_p per row, produced as a lane-dense (1, tb) row.

    The feature-dim reduction is done as an MXU mat-vec (ones @ res^T) so the
    per-row result lands lane-major without any transpose before the store.
    """
    if p == 2:
        a = res * res
    elif p == 1:
        a = jnp.abs(res)
    else:
        a = jnp.power(jnp.abs(res), float(p))
    ones_row = jnp.ones((1, a.shape[-1]), jnp.float32)
    s = lax.dot_general(ones_row, a, (((1,), (1,)), ((), ())),
                        precision=lax.Precision.HIGHEST,
                        preferred_element_type=jnp.float32)   # (1, tb)
    if p == 2:
        return -jnp.sqrt(s)
    elif p == 1:
        return -s
    else:
        return -jnp.power(s, 1.0 / float(p))


def _onehot_gather(table_f32, idx_col, n_rows, tb):
    """Gather `tb` rows of `table_f32` ((n_rows, D)) at `idx_col` ((tb, 1)).

    Exact one-hot MXU matmul (HIGHEST precision keeps f32 values intact).
    """
    iota = lax.broadcasted_iota(jnp.int32, (tb, n_rows), 1)
    onehot = (idx_col == iota).astype(jnp.float32)
    return jnp.dot(onehot, table_f32,
                   precision=lax.Precision.HIGHEST,
                   preferred_element_type=jnp.float32)


# ----------------------------------------------------------------------------
# Path A: both tables fully VMEM-resident (no per-row DMA at all).
# ----------------------------------------------------------------------------
def _resident_kernel(idx_ref, ent_ref, rel_ref, o_ref, *, p):
    """idx_ref: (tb, 3) i32 VMEM; ent/rel_ref: resident tables; o_ref: (1,1,tb)."""
    tb = idx_ref.shape[0]
    idx = idx_ref[...]                                  # (tb, 3)
    ent = ent_ref[...].astype(jnp.float32)
    rel = rel_ref[...].astype(jnp.float32)

    h = _onehot_gather(ent, idx[:, 0:1], ent_ref.shape[0], tb)
    t = _onehot_gather(ent, idx[:, 1:2], ent_ref.shape[0], tb)
    r = _onehot_gather(rel, idx[:, 2:3], rel_ref.shape[0], tb)

    res = _normalize(h, p) + _normalize(r, p) - _normalize(t, p)
    score = _score_lane_dense(res, p)                   # (1, tb) lane-dense
    o_ref[...] = score.reshape(o_ref.shape).astype(o_ref.dtype)


# ----------------------------------------------------------------------------
# Path B: entity rows DMA-gathered from HBM (double-buffered across tiles),
#         relation table VMEM-resident.
# ----------------------------------------------------------------------------
def _gather_kernel(idx_smem, idx_ref, rel_ref, ent_hbm, o_ref,
                   h_buf, t_buf, sems, *, p):
    """idx_smem: (3, B_pad) i32 SMEM (scalar prefetch, DMA addressing)
    idx_ref : (tb, 3) i32 VMEM block (for the relation one-hot gather)
    rel_ref : (num_rel_pad, d_pad) VMEM-resident relation table
    ent_hbm : (num_ent_pad, d_pad) entity table left in HBM (pl.ANY)
    o_ref   : (1, 1, tb) lane-dense output block
    h_buf/t_buf: (2, tb, d_pad) double-buffered gather scratch; sems: (2, 2)
    """
    tb = h_buf.shape[1]
    g = pl.program_id(0)
    n = pl.num_programs(0)
    slot = g % 2

    def issue(tile, slot_):
        base = tile * tb
        def body(i, carry):
            row = base + i
            pltpu.make_async_copy(
                ent_hbm.at[pl.ds(idx_smem[0, row], 1)],
                h_buf.at[slot_, pl.ds(i, 1)],
                sems.at[slot_, 0]).start()
            pltpu.make_async_copy(
                ent_hbm.at[pl.ds(idx_smem[1, row], 1)],
                t_buf.at[slot_, pl.ds(i, 1)],
                sems.at[slot_, 1]).start()
            return carry
        # Unrolled so the scheduler can interleave SMEM index loads, address
        # math and descriptor pushes across iterations.
        lax.fori_loop(0, tb, body, None, unroll=8)

    # Prime the pipeline: tile 0's gathers go into slot 0.
    @pl.when(g == 0)
    def _prime():
        issue(0, 0)

    # Prefetch the NEXT tile into the other slot before blocking on this one.
    @pl.when(g + 1 < n)
    def _prefetch_next():
        issue(g + 1, 1 - slot)

    # One aggregate wait per gather buffer: the descriptor's byte count equals
    # the sum of the `tb` single-row copies issued on the same semaphore.
    # (tb <= num_ent rows, enforced in the wrapper, so the source window is
    #  always in bounds; the wait only consumes the semaphore.)
    pltpu.make_async_copy(ent_hbm.at[pl.ds(0, tb)], h_buf.at[slot],
                          sems.at[slot, 0]).wait()
    pltpu.make_async_copy(ent_hbm.at[pl.ds(0, tb)], t_buf.at[slot],
                          sems.at[slot, 1]).wait()

    h = h_buf[slot].astype(jnp.float32)
    t = t_buf[slot].astype(jnp.float32)

    # Relation rows come from the VMEM-resident table via a one-hot matmul.
    idx = idx_ref[...]                                  # (tb, 3)
    rel = rel_ref[...].astype(jnp.float32)
    r = _onehot_gather(rel, idx[:, 2:3], rel_ref.shape[0], tb)

    res = _normalize(h, p) + _normalize(r, p) - _normalize(t, p)
    score = _score_lane_dense(res, p)                   # (1, tb) lane-dense
    o_ref[...] = score.reshape(o_ref.shape).astype(o_ref.dtype)


# ----------------------------------------------------------------------------
# Wrapper
# ----------------------------------------------------------------------------
def transe_forward(ent_table, rel_table, batch, *, p=P_NORM,
                   force_dma_gather=False):
    """ent_table: (num_ent, D), rel_table: (num_rel, D), batch: (B, 3) int -> (B,)."""
    batch = jnp.asarray(batch, jnp.int32)
    B = int(batch.shape[0])
    num_ent, D = int(ent_table.shape[0]), int(ent_table.shape[1])
    num_rel = int(rel_table.shape[0])

    # Lane-pad the embedding dim and sublane-pad the tables (zero padding is
    # exact for p-norms; padded rows are never indexed).
    d_pad = _round_up(D, _LANE)
    num_ent_pad = _round_up(num_ent, _SUBLANE)
    num_rel_pad = _round_up(num_rel, _SUBLANE)
    ent_p = jnp.pad(ent_table, ((0, num_ent_pad - num_ent), (0, d_pad - D)))
    rel_p = jnp.pad(rel_table, ((0, num_rel_pad - num_rel), (0, d_pad - D)))
    itemsize = ent_p.dtype.itemsize

    # Resident fast path: both tables are DMA'd once into VMEM (constant
    # index_map) and rows are picked with an exact one-hot MXU matmul.
    table_bytes = (num_ent_pad + num_rel_pad) * d_pad * itemsize
    resident = (not force_dma_gather
                and num_ent_pad <= _RESIDENT_MAX_ROWS
                and 2 * table_bytes <= _RESIDENT_MAX_TABLE_BYTES)

    # Batch tiling: choose tb to minimize tail padding (<= 7 wasted rows/tile).
    max_rows = _MAX_TILE_ROWS
    if not resident:
        max_rows = min(max_rows,
                       max(1, _GATHER_SCRATCH_BUDGET // (4 * itemsize * d_pad)))
        max_rows = min(max_rows, num_ent_pad)   # keep the wait window in bounds
    max_rows = max(_SUBLANE, (max_rows // _SUBLANE) * _SUBLANE)
    n_tiles = int(pl.cdiv(B, max_rows))
    tb = _round_up(int(pl.cdiv(B, n_tiles)), _SUBLANE)
    b_pad = n_tiles * tb

    idx_rows = batch                                     # (B, 3)
    if b_pad != B:
        idx_rows = jnp.pad(idx_rows, ((0, b_pad - B), (0, 0)))  # pad with row 0

    out_shape = jax.ShapeDtypeStruct((n_tiles, 1, tb), jnp.float32)

    if resident:
        out = pl.pallas_call(
            functools.partial(_resident_kernel, p=p),
            out_shape=out_shape,
            grid_spec=pltpu.PrefetchScalarGridSpec(
                num_scalar_prefetch=0,
                grid=(n_tiles,),
                in_specs=[
                    pl.BlockSpec((tb, 3), lambda g: (g, 0)),               # indices
                    pl.BlockSpec((num_ent_pad, d_pad), lambda g: (0, 0)),  # resident
                    pl.BlockSpec((num_rel_pad, d_pad), lambda g: (0, 0)),  # resident
                ],
                out_specs=pl.BlockSpec((1, 1, tb), lambda g: (g, 0, 0)),
            ),
            compiler_params=pltpu.CompilerParams(
                dimension_semantics=("parallel",),      # tiles are independent
                vmem_limit_bytes=_VMEM_LIMIT,
            ),
        )(idx_rows, ent_p, rel_p)
    else:
        # (3, B_pad): long axis last keeps the SMEM footprint small.
        idx_cols = idx_rows.T
        # TODO(synk): if the relation table is ever too large for VMEM
        # residency, fall back to DMA-gathering r rows like h/t.
        out = pl.pallas_call(
            functools.partial(_gather_kernel, p=p),
            out_shape=out_shape,
            grid_spec=pltpu.PrefetchScalarGridSpec(
                num_scalar_prefetch=1,
                grid=(n_tiles,),
                in_specs=[
                    pl.BlockSpec((tb, 3), lambda g, idx_smem: (g, 0)),
                    pl.BlockSpec((num_rel_pad, d_pad),
                                 lambda g, idx_smem: (0, 0)),   # rel resident
                    pl.BlockSpec(memory_space=pl.ANY),          # ent stays in HBM
                ],
                out_specs=pl.BlockSpec((1, 1, tb), lambda g, idx_smem: (g, 0, 0)),
                scratch_shapes=[
                    pltpu.VMEM((2, tb, d_pad), ent_p.dtype),    # h rows (2 slots)
                    pltpu.VMEM((2, tb, d_pad), ent_p.dtype),    # t rows (2 slots)
                    pltpu.SemaphoreType.DMA((2, 2)),
                ],
            ),
            compiler_params=pltpu.CompilerParams(
                dimension_semantics=("arbitrary",),   # slot state carried across steps
                vmem_limit_bytes=_VMEM_LIMIT,
            ),
        )(idx_cols, idx_rows, rel_p, ent_p)

    return out.reshape(-1)[:B]   # drop padded tail rows


class TransETypePallas:
    """Deterministically-initialized stand-in for the PyTorch TransE_type."""

    def __init__(self, num_ent, num_rel, dim, p_norm, key):
        self.num_ent = num_ent
        self.num_rel = num_rel
        self.dim = dim
        self.p_norm = p_norm
        init_range = 6.0 / jnp.sqrt(jnp.float32(dim))
        k_ent, k_rel = jax.random.split(key)
        self.ent_embeddings = jax.random.uniform(
            k_ent, (num_ent, dim), jnp.float32, -init_range, init_range)
        self.rel_embeddings = jax.random.uniform(
            k_rel, (num_rel, dim), jnp.float32, -init_range, init_range)

    def __call__(self, batch, *, force_dma_gather=False):
        return transe_forward(self.ent_embeddings, self.rel_embeddings, batch,
                              p=self.p_norm, force_dma_gather=force_dma_gather)


def _reference(ent, rel, batch, p):
    h = jnp.take(ent, batch[:, 0], axis=0)
    t = jnp.take(ent, batch[:, 1], axis=0)
    r = jnp.take(rel, batch[:, 2], axis=0)

    def norm(x):
        n = jnp.linalg.norm(x, ord=p, axis=-1, keepdims=True)
        return x / jnp.maximum(n, _EPS)

    res = norm(h) + norm(r) - norm(t)
    return -jnp.linalg.norm(res, ord=p, axis=-1)


if __name__ == "__main__":
    key = jax.random.PRNGKey(0)
    k_model, k_batch = jax.random.split(key)

    num_ent, num_rel, dim = 32, 8, 32
    model = TransETypePallas(num_ent, num_rel, dim, P_NORM, k_model)

    def make_batch(k, b):
        kh, kt, kr = jax.random.split(k, 3)
        return jnp.stack([
            jax.random.randint(kh, (b,), 0, num_ent, dtype=jnp.int32),
            jax.random.randint(kt, (b,), 0, num_ent, dtype=jnp.int32),
            jax.random.randint(kr, (b,), 0, num_rel, dtype=jnp.int32),
        ], axis=1)

    # Exercise both paths: resident one-hot gather (default for small tables)
    # and the double-buffered DMA-gather fallback, with single- and multi-tile
    # batch sizes (520 is not a multiple of the tile size -> tail padding).
    cases = [(8, False), (520, False), (8, True), (520, True)]
    for i, (b, forced) in enumerate(cases):
        batch = make_batch(jax.random.fold_in(k_batch, i), b)
        out = jax.block_until_ready(model(batch, force_dma_gather=forced))
        ref = _reference(model.ent_embeddings, model.rel_embeddings, batch,
                         P_NORM)
        assert out.shape == (b,), (out.shape, b)
        assert jnp.allclose(out, ref, atol=1e-4, rtol=1e-4), (b, forced, out, ref)

    print("KERNEL_OK")
</pallas_src>

<mosaic_0001>
module attributes {stable_mosaic.version = 11 : i64} {
  func.func @_resident_kernel(%arg0: i32, %arg1: memref<8x3xi32, #tpu.memory_space<vmem>>, %arg2: memref<32x128xf32, #tpu.memory_space<vmem>>, %arg3: memref<8x128xf32, #tpu.memory_space<vmem>>, %arg4: memref<1x1x8xf32, #tpu.memory_space<vmem>>) attributes {dimension_semantics = [#tpu.dimension_semantics<parallel>], iteration_bounds = array<i64: 1>, scalar_prefetch = 0 : i64, scratch_operands = 0 : i64, tpu.core_type = #tpu.core_type<tc>, window_params = [{transform_indices = @transform_0, window_bounds = array<i64: 8, 3>}, {pipeline_mode = #tpu.pipeline_mode<synchronous>, transform_indices = @transform_1, window_bounds = array<i64: 32, 128>}, {pipeline_mode = #tpu.pipeline_mode<synchronous>, transform_indices = @transform_2, window_bounds = array<i64: 8, 128>}, {transform_indices = @transform_3, window_bounds = array<i64: 1, 1, 8>}]} {
    %c0 = arith.constant 0 : index
    %c0_0 = arith.constant 0 : index
    %0 = vector.load %arg1[%c0, %c0_0] : memref<8x3xi32, #tpu.memory_space<vmem>>, vector<8x3xi32>
    %c0_1 = arith.constant 0 : index
    %c0_2 = arith.constant 0 : index
    %1 = vector.load %arg2[%c0_1, %c0_2] : memref<32x128xf32, #tpu.memory_space<vmem>>, vector<32x128xf32>
    %c0_3 = arith.constant 0 : index
    %c0_4 = arith.constant 0 : index
    %2 = vector.load %arg3[%c0_3, %c0_4] : memref<8x128xf32, #tpu.memory_space<vmem>>, vector<8x128xf32>
    %3 = vector.extract_strided_slice %0 {offsets = [0, 0], sizes = [8, 1], strides = [1, 1]} : vector<8x3xi32> to vector<8x1xi32>
    %4 = tpu.iota {dimensions = array<i32: 1>} : vector<8x32xi32>
    %5 = vector.broadcast %3 : vector<8x1xi32> to vector<8x32xi32>
    %6 = arith.cmpi eq, %5, %4 : vector<8x32xi32>
    %7 = arith.extui %6 : vector<8x32xi1> to vector<8x32xi32>
    %8 = arith.sitofp %7 : vector<8x32xi32> to vector<8x32xf32>
    %cst = arith.constant dense<0.000000e+00> : vector<8x128xf32>
    %9 = tpu.matmul %8, %1, %cst {dimension_numbers = #tpu.dot_dimension_numbers<[1], [0], [0], [1], [0, 0, 1, 1], [], []>, precision = #tpu.contract_precision<fp32>} : vector<8x32xf32>, vector<32x128xf32>, vector<8x128xf32> -> vector<8x128xf32>
    %10 = vector.extract_strided_slice %0 {offsets = [0, 1], sizes = [8, 1], strides = [1, 1]} : vector<8x3xi32> to vector<8x1xi32>
    %11 = tpu.iota {dimensions = array<i32: 1>} : vector<8x32xi32>
    %12 = vector.broadcast %10 : vector<8x1xi32> to vector<8x32xi32>
    %13 = arith.cmpi eq, %12, %11 : vector<8x32xi32>
    %14 = arith.extui %13 : vector<8x32xi1> to vector<8x32xi32>
    %15 = arith.sitofp %14 : vector<8x32xi32> to vector<8x32xf32>
    %cst_5 = arith.constant dense<0.000000e+00> : vector<8x128xf32>
    %16 = tpu.matmul %15, %1, %cst_5 {dimension_numbers = #tpu.dot_dimension_numbers<[1], [0], [0], [1], [0, 0, 1, 1], [], []>, precision = #tpu.contract_precision<fp32>} : vector<8x32xf32>, vector<32x128xf32>, vector<8x128xf32> -> vector<8x128xf32>
    %17 = vector.extract_strided_slice %0 {offsets = [0, 2], sizes = [8, 1], strides = [1, 1]} : vector<8x3xi32> to vector<8x1xi32>
    %18 = tpu.iota {dimensions = array<i32: 1>} : vector<8x8xi32>
    %19 = vector.broadcast %17 : vector<8x1xi32> to vector<8x8xi32>
    %20 = arith.cmpi eq, %19, %18 : vector<8x8xi32>
    %21 = arith.extui %20 : vector<8x8xi1> to vector<8x8xi32>
    %22 = arith.sitofp %21 : vector<8x8xi32> to vector<8x8xf32>
    %cst_6 = arith.constant dense<0.000000e+00> : vector<8x128xf32>
    %23 = tpu.matmul %22, %2, %cst_6 {dimension_numbers = #tpu.dot_dimension_numbers<[1], [0], [0], [1], [0, 0, 1, 1], [], []>, precision = #tpu.contract_precision<fp32>} : vector<8x8xf32>, vector<8x128xf32>, vector<8x128xf32> -> vector<8x128xf32>
    %24 = arith.mulf %9, %9 : vector<8x128xf32>
    %cst_7 = arith.constant dense<0.000000e+00> : vector<8xf32>
    %25 = vector.multi_reduction <add>, %24, %cst_7 [1] : vector<8x128xf32> to vector<8xf32>
    %26 = vector.shape_cast %25 : vector<8xf32> to vector<8x1xf32>
    %cst_8 = arith.constant 1.000000e-24 : f32
    %27 = vector.broadcast %cst_8 : f32 to vector<8x1xf32>
    %28 = arith.maximumf %26, %27 : vector<8x1xf32>
    %29 = math.rsqrt %28 : vector<8x1xf32>
    %30 = vector.broadcast %29 : vector<8x1xf32> to vector<8x128xf32>
    %31 = arith.mulf %9, %30 : vector<8x128xf32>
    %32 = arith.mulf %23, %23 : vector<8x128xf32>
    %cst_9 = arith.constant dense<0.000000e+00> : vector<8xf32>
    %33 = vector.multi_reduction <add>, %32, %cst_9 [1] : vector<8x128xf32> to vector<8xf32>
    %34 = vector.shape_cast %33 : vector<8xf32> to vector<8x1xf32>
    %cst_10 = arith.constant 1.000000e-24 : f32
    %35 = vector.broadcast %cst_10 : f32 to vector<8x1xf32>
    %36 = arith.maximumf %34, %35 : vector<8x1xf32>
    %37 = math.rsqrt %36 : vector<8x1xf32>
    %38 = vector.broadcast %37 : vector<8x1xf32> to vector<8x128xf32>
    %39 = arith.mulf %23, %38 : vector<8x128xf32>
    %40 = arith.addf %31, %39 : vector<8x128xf32>
    %41 = arith.mulf %16, %16 : vector<8x128xf32>
    %cst_11 = arith.constant dense<0.000000e+00> : vector<8xf32>
    %42 = vector.multi_reduction <add>, %41, %cst_11 [1] : vector<8x128xf32> to vector<8xf32>
    %43 = vector.shape_cast %42 : vector<8xf32> to vector<8x1xf32>
    %cst_12 = arith.constant 1.000000e-24 : f32
    %44 = vector.broadcast %cst_12 : f32 to vector<8x1xf32>
    %45 = arith.maximumf %43, %44 : vector<8x1xf32>
    %46 = math.rsqrt %45 : vector<8x1xf32>
    %47 = vector.broadcast %46 : vector<8x1xf32> to vector<8x128xf32>
    %48 = arith.mulf %16, %47 : vector<8x128xf32>
    %49 = arith.subf %40, %48 : vector<8x128xf32>
    %50 = arith.mulf %49, %49 : vector<8x128xf32>
    %cst_13 = arith.constant 1.000000e+00 : f32
    %51 = vector.broadcast %cst_13 : f32 to vector<1x128xf32>
    %cst_14 = arith.constant dense<0.000000e+00> : vector<1x8xf32>
    %52 = tpu.matmul %51, %50, %cst_14 {dimension_numbers = #tpu.dot_dimension_numbers<[1], [1], [0], [0], [0, 0, 1, 0], [], []>, precision = #tpu.contract_precision<fp32>} : vector<1x128xf32>, vector<8x128xf32>, vector<1x8xf32> -> vector<1x8xf32>
    %53 = math.sqrt %52 : vector<1x8xf32>
    %cst_15 = arith.constant 0.000000e+00 : f32
    %54 = vector.broadcast %cst_15 : f32 to vector<1x8xf32>
    %55 = arith.subf %54, %53 : vector<1x8xf32>
    %56 = vector.shape_cast %55 : vector<1x8xf32> to vector<1x1x8xf32>
    %c0_16 = arith.constant 0 : index
    %c0_17 = arith.constant 0 : index
    %c0_18 = arith.constant 0 : index
    %57 = vector.load %arg4[%c0_16, %c0_17, %c0_18] : memref<1x1x8xf32, #tpu.memory_space<vmem>>, vector<1x1x8xf32>
    tpu.vector_store %arg4[%c0_16, %c0_17, %c0_18], %56 {strides = array<i32>} : memref<1x1x8xf32, #tpu.memory_space<vmem>>, vector<1x1x8xf32>,
    return
  }
  func.func @transform_0(%arg0: i32) -> (i32, i32) {
    %c0_i32 = arith.constant 0 : i32
    %c0_i32_0 = arith.constant 0 : i32
    return %arg0, %c0_i32 : i32, i32
  }
  func.func @transform_1(%arg0: i32) -> (i32, i32) {
    %c0_i32 = arith.constant 0 : i32
    %c0_i32_0 = arith.constant 0 : i32
    %c0_i32_1 = arith.constant 0 : i32
    return %c0_i32, %c0_i32_0 : i32, i32
  }
  func.func @transform_2(%arg0: i32) -> (i32, i32) {
    %c0_i32 = arith.constant 0 : i32
    %c0_i32_0 = arith.constant 0 : i32
    %c0_i32_1 = arith.constant 0 : i32
    return %c0_i32, %c0_i32_0 : i32, i32
  }
  func.func @transform_3(%arg0: i32) -> (i32, i32, i32) {
    %c0_i32 = arith.constant 0 : i32
    %c0_i32_0 = arith.constant 0 : i32
    %c0_i32_1 = arith.constant 0 : i32
    return %arg0, %c0_i32, %c0_i32_0 : i32, i32, i32
  }
}

</mosaic_0001>

<llo_original>
// kernel: tpu_custom_call.1
$region0: #{tpu_custom_call.1}
  #allocation0 [shape = 'u32[]', space=smem, size = 0x4, offset = 0x4, fixed_abs, tag = 'smem constant byte address 0x4 - core index']
  #allocation1 [shape = 'u32[144,128]{1,0:T(1,128)}', space=vmem, size = 0x12000, scoped, tag = 'internal scratch']
  %s0 = inlined_call_operand.vmem [shape: s32[8,3], index: 0, kind: input, shape index: {}]
  %s1 = inlined_call_operand.hbm [shape: f32[32,128], index: 1, kind: input, shape index: {}]
  %s2 = inlined_call_operand.vmem [shape: f32[8,128], index: 2, kind: input, shape index: {}]
  %s3 = inlined_call_operand.hbm [shape: f32[1,1,8], index: 3, kind: output, shape index: {}]
  %s4 = sld [smem:[#allocation0]]
  $region26: #{tpu_custom_call.1} parent=0
    _
  %s6 = ssub.s32 1, %s4
  %s7 = scalar_select 0, %s6, %s4
  $region1: #{tpu_custom_call.1} parent=0
    #allocation2 [shape = 'u8[16384]{0}', space=vmem, size = 0x4000, scoped, tag = 'input window, operand 1, single buffered']
    #allocation3 [shape = 's32[1]{0}', space=sflag, size = 0x4, scoped, tag = 'scoped memory for tpu_custom_call.1']
    #allocation4 [shape = 's32[1]{0}', space=sflag, size = 0x4, scoped, tag = 'scoped memory for tpu_custom_call.1']
    #allocation5 [shape = 'u8[512]{0}', space=vmem, size = 0x400, scoped, tag = 'output window, operand 0, single buffered']
    %8 = vsyncpa [#allocation3], 0
    %9 = vsyncpa [#allocation4], 0
    // Predicated region
    $region2: #{tpu_custom_call.1} parent=1 // pred_check
      _
    $region3: #{tpu_custom_call.1} parent=1 // pred_check_branch
      %11 = sbr.rel (0) target = $region5
    $region4: #{tpu_custom_call.1} parent=1 // pred_region
      _
    $region5: #{tpu_custom_call.1} parent=1 // pred_fallthru
      _
    // Predicated region
    $region6: #{tpu_custom_call.1} parent=1 // pred_check
      _
    $region7: #{tpu_custom_call.1} parent=1 // pred_check_branch
      %13 = sbr.rel (0) target = $region9
    $region8: #{tpu_custom_call.1} parent=1 // pred_region
      %s15 = ssub.s32 512, 512
      %16 = vsyncadd [#allocation3], %s15
      %s17 = sshll.u32 [#allocation2], 4
      %s18 = int_to_ptr.vmem [resolvable:$true] %s17
      %23 = dma.hbm_to_vmem [thread:$0]  %s1, 512, %s18, [#allocation3], 128, 128, 8
    $region9: #{tpu_custom_call.1} parent=1 // pred_fallthru
      _
    // Predicated region
    $region10: #{tpu_custom_call.1} parent=1 // pred_check
      _
    $region11: #{tpu_custom_call.1} parent=1 // pred_check_branch
      %25 = sbr.rel (0) target = $region13
    $region12: #{tpu_custom_call.1} parent=1 // pred_region
      _
    $region13: #{tpu_custom_call.1} parent=1 // pred_fallthru
      _
    // Predicated region
    $region14: #{tpu_custom_call.1} parent=1 // pred_check
      _
    $region15: #{tpu_custom_call.1} parent=1 // pred_check_branch
      %27 = sbr.rel (0) target = $region17
    $region16: #{tpu_custom_call.1} parent=1 // pred_region
      %28 = dma.done [#allocation3], 512
    $region17: #{tpu_custom_call.1} parent=1 // pred_fallthru
      _
    %v29 = vld [vmem:[%s0] sm:$0xff]
    %v30 = vld [vmem:[#allocation2] sm:$0xff]
    %v31 = vld [vmem:[#allocation2 + $0x8] sm:$0xff]
    %v32 = vld [vmem:[#allocation2 + $0x10] sm:$0xff]
    %v33 = vld [vmem:[#allocation2 + $0x18] sm:$0xff]
    %v34 = vld [vmem:[%s2] sm:$0xff]
    %v35 = vlaneseq
    %v36 = vand.u32 %v35, 127
    %37 = vset.pattern.permute.xlu0 0
    %38 = vperm.xlu0 %37, %v29
    %v39 = vpop.permute.xlu0 %38
    %vm40 = vcmp.eq.s32.totalorder %v39, %v36
    %v41 = vsel %vm40, 1, 0
    %v42 = vcvt.s32.f32 %v41
    %vm43 = vcmask 261120
    %v45 = vsel %vm43, %v42, 0
    %47 = vmatprep.subr.mxu0 0.0
    %48 = vmatpush1.msra.mxu0 0.0
    %49 = vmatprep.subr.mxu0 0.0
    %50 = vmatpush1.msra.mxu0 0.0
    %51 = vmatprep.subr.mxu0 0.0
    %52 = vmatpush1.msra.mxu0 0.0
    %53 = vmatprep.subr.mxu0 0.0
    %54 = vmatpush1.msra.mxu0 0.0
    %55 = vmatprep.subr.mxu0 0.0
    %56 = vmatpush1.msra.mxu0 0.0
    %57 = vmatprep.subr.mxu0 0.0
    %58 = vmatpush1.msra.mxu0 0.0
    %59 = vmatprep.subr.mxu0 0.0
    %60 = vmatpush1.msra.mxu0 0.0
    %61 = vmatprep.subr.mxu0 0.0
    %62 = vmatpush1.msra.mxu0 0.0
    %63 = vmatprep.subr.mxu0 0.0
    %64 = vmatpush1.msra.mxu0 0.0
    %65 = vmatprep.subr.mxu0 0.0
    %66 = vmatpush1.msra.mxu0 0.0
    %67 = vmatprep.subr.mxu0 0.0
    %68 = vmatpush1.msra.mxu0 0.0
    %69 = vmatprep.subr.mxu0 0.0
    %70 = vmatpush1.msra.mxu0 0.0
    %71 = vmatprep.subr.mxu0 0.0
    %v72 = vand.u32 %v33, 4294901760
    %73 = vmatpush1.msra.mxu0 %v72
    %74 = vmatprep.subr.mxu0 0.0
    %v75 = vand.u32 %v32, 4294901760
    %76 = vmatpush1.msra.mxu0 %v75
    %77 = vmatprep.subr.mxu0 0.0
    %v78 = vand.u32 %v31, 4294901760
    %79 = vmatpush1.msra.mxu0 %v78
    %80 = vmatprep.subr.mxu0 0.0
    %v81 = vand.u32 %v30, 4294901760
    %82 = vmatpush1.msra.mxu0 %v81
    %83 = vmatprep.subr.mxu0 0.0
    %84 = vmatpush2.msra.mxu0 0.0
    %85 = vmatprep.subr.mxu0 0.0
    %86 = vmatpush2.msra.mxu0 0.0
    %87 = vmatprep.subr.mxu0 0.0
    %88 = vmatpush2.msra.mxu0 0.0
    %89 = vmatprep.subr.mxu0 0.0
    %90 = vmatpush2.msra.mxu0 0.0
    %91 = vmatprep.subr.mxu0 0.0
    %92 = vmatpush2.msra.mxu0 0.0
    %93 = vmatprep.subr.mxu0 0.0
    %94 = vmatpush2.msra.mxu0 0.0
    %95 = vmatprep.subr.mxu0 0.0
    %96 = vmatpush2.msra.mxu0 0.0
    %97 = vmatprep.subr.mxu0 0.0
    %98 = vmatpush2.msra.mxu0 0.0
    %99 = vmatprep.subr.mxu0 0.0
    %100 = vmatpush2.msra.mxu0 0.0
    %101 = vmatprep.subr.mxu0 0.0
    %102 = vmatpush2.msra.mxu0 0.0
    %103 = vmatprep.subr.mxu0 0.0
    %104 = vmatpush2.msra.mxu0 0.0
    %105 = vmatprep.subr.mxu0 0.0
    %106 = vmatpush2.msra.mxu0 0.0
    %107 = vmatprep.subr.mxu0 0.0
    %108 = vmatpush2.msra.mxu0 0.0
    %109 = vmatprep.subr.mxu0 0.0
    %110 = vmatpush2.msra.mxu0 0.0
    %111 = vmatprep.subr.mxu0 0.0
    %112 = vmatpush2.msra.mxu0 0.0
    %113 = vmatprep.subr.mxu0 0.0
    %114 = vmatpush2.msra.mxu0 0.0
    %115 = vmatprep.mubr.f32.mxu0 0.0
    %v116 = vand.u32 %v45, 4294901760
    %v117 = vsub.f32 %v45, %v116
    %v118 = vand.u32 %v117, 4294901760
    %v119 = vsub.f32 %v117, %v118
    %v120 = vand.u32 %v119, 4294901760
    %121 = vmatmul.mubr.f32.gmra.mxu0 %v120
    %v122 = vpop.f32.mrf.mxu0
    %v123 = vadd.f32 0.0, %v122
    %v124 = vpop.f32.mrf.mxu0
    %125 = vdwg.mxu0
    %126 = vmatprep.subr.mxu0 0.0
    %127 = vmatpush1.msra.mxu0 0.0
    %128 = vmatprep.subr.mxu0 0.0
    %129 = vmatpush1.msra.mxu0 0.0
    %130 = vmatprep.subr.mxu0 0.0
    %131 = vmatpush1.msra.mxu0 0.0
    %132 = vmatprep.subr.mxu0 0.0
    %133 = vmatpush1.msra.mxu0 0.0
    %134 = vmatprep.subr.mxu0 0.0
    %135 = vmatpush1.msra.mxu0 0.0
    %136 = vmatprep.subr.mxu0 0.0
    %137 = vmatpush1.msra.mxu0 0.0
    %138 = vmatprep.subr.mxu0 0.0
    %139 = vmatpush1.msra.mxu0 0.0
    %140 = vmatprep.subr.mxu0 0.0
    %141 = vmatpush1.msra.mxu0 0.0
    %142 = vmatprep.subr.mxu0 0.0
    %143 = vmatpush1.msra.mxu0 0.0
    %144 = vmatprep.subr.mxu0 0.0
    %145 = vmatpush1.msra.mxu0 0.0
    %146 = vmatprep.subr.mxu0 0.0
    %147 = vmatpush1.msra.mxu0 0.0
    %148 = vmatprep.subr.mxu0 0.0
    %149 = vmatpush1.msra.mxu0 0.0
    %150 = vmatprep.subr.mxu0 0.0
    %v151 = vand.u32 %v33, 4294901760
    %v152 = vsub.f32 %v33, %v151
    %v153 = vand.u32 %v152, 4294901760
    %v154 = vsub.f32 %v152, %v153
    %v155 = vand.u32 %v154, 4294901760
    %156 = vmatpush1.msra.mxu0 %v155
    %157 = vmatprep.subr.mxu0 0.0
    %v158 = vand.u32 %v32, 4294901760
    %v159 = vsub.f32 %v32, %v158
    %v160 = vand.u32 %v159, 4294901760
    %v161 = vsub.f32 %v159, %v160
    %v162 = vand.u32 %v161, 4294901760
    %163 = vmatpush1.msra.mxu0 %v162
    %164 = vmatprep.subr.mxu0 0.0
    %v165 = vand.u32 %v31, 4294901760
    %v166 = vsub.f32 %v31, %v165
    %v167 = vand.u32 %v166, 4294901760
    %v168 = vsub.f32 %v166, %v167
    %v169 = vand.u32 %v168, 4294901760
    %170 = vmatpush1.msra.mxu0 %v169
    %171 = vmatprep.subr.mxu0 0.0
    %v172 = vand.u32 %v30, 4294901760
    %v173 = vsub.f32 %v30, %v172
    %v174 = vand.u32 %v173, 4294901760
    %v175 = vsub.f32 %v173, %v174
    %v176 = vand.u32 %v175, 4294901760
    %177 = vmatpush1.msra.mxu0 %v176
    %178 = vmatprep.subr.mxu0 0.0
    %179 = vmatpush2.msra.mxu0 0.0
    %180 = vmatprep.subr.mxu0 0.0
    %181 = vmatpush2.msra.mxu0 0.0
    %182 = vmatprep.subr.mxu0 0.0
    %183 = vmatpush2.msra.mxu0 0.0
    %184 = vmatprep.subr.mxu0 0.0
    %185 = vmatpush2.msra.mxu0 0.0
    %186 = vmatprep.subr.mxu0 0.0
    %187 = vmatpush2.msra.mxu0 0.0
    %188 = vmatprep.subr.mxu0 0.0
    %189 = vmatpush2.msra.mxu0 0.0
    %190 = vmatprep.subr.mxu0 0.0
    %191 = vmatpush2.msra.mxu0 0.0
    %192 = vmatprep.subr.mxu0 0.0
    %193 = vmatpush2.msra.mxu0 0.0
    %194 = vmatprep.subr.mxu0 0.0
    %195 = vmatpush2.msra.mxu0 0.0
    %196 = vmatprep.subr.mxu0 0.0
    %197 = vmatpush2.msra.mxu0 0.0
    %198 = vmatprep.subr.mxu0 0.0
    %199 = vmatpush2.msra.mxu0 0.0
    %200 = vmatprep.subr.mxu0 0.0
    %201 = vmatpush2.msra.mxu0 0.0
    %202 = vmatprep.subr.mxu0 0.0
    %203 = vmatpush2.msra.mxu0 0.0
    %204 = vmatprep.subr.mxu0 0.0
    %205 = vmatpush2.msra.mxu0 0.0
    %206 = vmatprep.subr.mxu0 0.0
    %207 = vmatpush2.msra.mxu0 0.0
    %208 = vmatprep.subr.mxu0 0.0
    %209 = vmatpush2.msra.mxu0 0.0
    %210 = vmatprep.mubr.f32.mxu0 0.0
    %v211 = vand.u32 %v45, 4294901760
    %212 = vmatmul.mubr.f32.gmra.mxu0 %v211
    %v213 = vpop.f32.mrf.mxu0
    %v214 = vadd.f32 %v123, %v213
    %v215 = vpop.f32.mrf.mxu0
    %216 = vdwg.mxu0
    %217 = vmatprep.subr.mxu0 0.0
    %218 = vmatpush1.msra.mxu0 0.0
    %219 = vmatprep.subr.mxu0 0.0
    %220 = vmatpush1.msra.mxu0 0.0
    %221 = vmatprep.subr.mxu0 0.0
    %222 = vmatpush1.msra.mxu0 0.0
    %223 = vmatprep.subr.mxu0 0.0
    %224 = vmatpush1.msra.mxu0 0.0
    %225 = vmatprep.subr.mxu0 0.0
    %226 = vmatpush1.msra.mxu0 0.0
    %227 = vmatprep.subr.mxu0 0.0
    %228 = vmatpush1.msra.mxu0 0.0
    %229 = vmatprep.subr.mxu0 0.0
    %230 = vmatpush1.msra.mxu0 0.0
    %231 = vmatprep.subr.mxu0 0.0
    %232 = vmatpush1.msra.mxu0 0.0
    %233 = vmatprep.subr.mxu0 0.0
    %234 = vmatpush1.msra.mxu0 0.0
    %235 = vmatprep.subr.mxu0 0.0
    %236 = vmatpush1.msra.mxu0 0.0
    %237 = vmatprep.subr.mxu0 0.0
    %238 = vmatpush1.msra.mxu0 0.0
    %239 = vmatprep.subr.mxu0 0.0
    %240 = vmatpush1.msra.mxu0 0.0
    %241 = vmatprep.subr.mxu0 0.0
    %v242 = vand.u32 %v33, 4294901760
    %v243 = vsub.f32 %v33, %v242
    %244 = vmatpush1.msra.mxu0 %v243
    %245 = vmatprep.subr.mxu0 0.0
    %v246 = vand.u32 %v32, 4294901760
    %v247 = vsub.f32 %v32, %v246
    %248 = vmatpush1.msra.mxu0 %v247
    %249 = vmatprep.subr.mxu0 0.0
    %v250 = vand.u32 %v31, 4294901760
    %v251 = vsub.f32 %v31, %v250
    %252 = vmatpush1.msra.mxu0 %v251
    %253 = vmatprep.subr.mxu0 0.0
    %v254 = vand.u32 %v30, 4294901760
    %v255 = vsub.f32 %v30, %v254
    %256 = vmatpush1.msra.mxu0 %v255
    %257 = vmatprep.subr.mxu0 0.0
    %258 = vmatpush2.msra.mxu0 0.0
    %259 = vmatprep.subr.mxu0 0.0
    %260 = vmatpush2.msra.mxu0 0.0
    %261 = vmatprep.subr.mxu0 0.0
    %262 = vmatpush2.msra.mxu0 0.0
    %263 = vmatprep.subr.mxu0 0.0
    %264 = vmatpush2.msra.mxu0 0.0
    %265 = vmatprep.subr.mxu0 0.0
    %266 = vmatpush2.msra.mxu0 0.0
    %267 = vmatprep.subr.mxu0 0.0
    %268 = vmatpush2.msra.mxu0 0.0
    %269 = vmatprep.subr.mxu0 0.0
    %270 = vmatpush2.msra.mxu0 0.0
    %271 = vmatprep.subr.mxu0 0.0
    %272 = vmatpush2.msra.mxu0 0.0
    %273 = vmatprep.subr.mxu0 0.0
    %274 = vmatpush2.msra.mxu0 0.0
    %275 = vmatprep.subr.mxu0 0.0
    %276 = vmatpush2.msra.mxu0 0.0
    %277 = vmatprep.subr.mxu0 0.0
    %278 = vmatpush2.msra.mxu0 0.0
    %279 = vmatprep.subr.mxu0 0.0
    %280 = vmatpush2.msra.mxu0 0.0
    %281 = vmatprep.subr.mxu0 0.0
    %282 = vmatpush2.msra.mxu0 0.0
    %283 = vmatprep.subr.mxu0 0.0
    %284 = vmatpush2.msra.mxu0 0.0
    %285 = vmatprep.subr.mxu0 0.0
    %286 = vmatpush2.msra.mxu0 0.0
    %287 = vmatprep.subr.mxu0 0.0
    %288 = vmatpush2.msra.mxu0 0.0
    %289 = vmatprep.mubr.f32.mxu0 0.0
    %v290 = vand.u32 %v45, 4294901760
    %v291 = vsub.f32 %v45, %v290
    %292 = vmatmul.mubr.f32.gmra.mxu0 %v291
    %v293 = vpop.f32.mrf.mxu0
    %v294 = vadd.f32 %v214, %v293
    %v295 = vpop.f32.mrf.mxu0
    %296 = vdwg.mxu0
    %297 = vmatprep.subr.mxu0 0.0
    %298 = vmatpush1.msra.mxu0 0.0
    %299 = vmatprep.subr.mxu0 0.0
    %300 = vmatpush1.msra.mxu0 0.0
    %301 = vmatprep.subr.mxu0 0.0
    %302 = vmatpush1.msra.mxu0 0.0
    %303 = vmatprep.subr.mxu0 0.0
    %304 = vmatpush1.msra.mxu0 0.0
    %305 = vmatprep.subr.mxu0 0.0
    %306 = vmatpush1.msra.mxu0 0.0
    %307 = vmatprep.subr.mxu0 0.0
    %308 = vmatpush1.msra.mxu0 0.0
    %309 = vmatprep.subr.mxu0 0.0
    %310 = vmatpush1.msra.mxu0 0.0
    %311 = vmatprep.subr.mxu0 0.0
    %312 = vmatpush1.msra.mxu0 0.0
    %313 = vmatprep.subr.mxu0 0.0
    %314 = vmatpush1.msra.mxu0 0.0
    %315 = vmatprep.subr.mxu0 0.0
    %316 = vmatpush1.msra.mxu0 0.0
    %317 = vmatprep.subr.mxu0 0.0
    %318 = vmatpush1.msra.mxu0 0.0
    %319 = vmatprep.subr.mxu0 0.0
    %320 = vmatpush1.msra.mxu0 0.0
    %321 = vmatprep.subr.mxu0 0.0
    %v322 = vand.u32 %v33, 4294901760
    %323 = vmatpush1.msra.mxu0 %v322
    %324 = vmatprep.subr.mxu0 0.0
    %v325 = vand.u32 %v32, 4294901760
    %326 = vmatpush1.msra.mxu0 %v325
    %327 = vmatprep.subr.mxu0 0.0
    %v328 = vand.u32 %v31, 4294901760
    %329 = vmatpush1.msra.mxu0 %v328
    %330 = vmatprep.subr.mxu0 0.0
    %v331 = vand.u32 %v30, 4294901760
    %332 = vmatpush1.msra.mxu0 %v331
    %333 = vmatprep.subr.mxu0 0.0
    %334 = vmatpush2.msra.mxu0 0.0
    %335 = vmatprep.subr.mxu0 0.0
    %336 = vmatpush2.msra.mxu0 0.0
    %337 = vmatprep.subr.mxu0 0.0
    %338 = vmatpush2.msra.mxu0 0.0
    %339 = vmatprep.subr.mxu0 0.0
    %340 = vmatpush2.msra.mxu0 0.0
    %341 = vmatprep.subr.mxu0 0.0
    %342 = vmatpush2.msra.mxu0 0.0
    %343 = vmatprep.subr.mxu0 0.0
    %344 = vmatpush2.msra.mxu0 0.0
    %345 = vmatprep.subr.mxu0 0.0
    %346 = vmatpush2.msra.mxu0 0.0
    %347 = vmatprep.subr.mxu0 0.0
    %348 = vmatpush2.msra.mxu0 0.0
    %349 = vmatprep.subr.mxu0 0.0
    %350 = vmatpush2.msra.mxu0 0.0
    %351 = vmatprep.subr.mxu0 0.0
    %352 = vmatpush2.msra.mxu0 0.0
    %353 = vmatprep.subr.mxu0 0.0
    %354 = vmatpush2.msra.mxu0 0.0
    %355 = vmatprep.subr.mxu0 0.0
    %356 = vmatpush2.msra.mxu0 0.0
    %357 = vmatprep.subr.mxu0 0.0
    %358 = vmatpush2.msra.mxu0 0.0
    %359 = vmatprep.subr.mxu0 0.0
    %360 = vmatpush2.msra.mxu0 0.0
    %361 = vmatprep.subr.mxu0 0.0
    %362 = vmatpush2.msra.mxu0 0.0
    %363 = vmatprep.subr.mxu0 0.0
    %364 = vmatpush2.msra.mxu0 0.0
    %365 = vmatprep.mubr.f32.mxu0 0.0
    %v366 = vand.u32 %v45, 4294901760
    %v367 = vsub.f32 %v45, %v366
    %v368 = vand.u32 %v367, 4294901760
    %369 = vmatmul.mubr.f32.gmra.mxu0 %v368
    %v370 = vpop.f32.mrf.mxu0
    %v371 = vadd.f32 %v294, %v370
    %v372 = vpop.f32.mrf.mxu0
    %373 = vdwg.mxu0
    %374 = vmatprep.subr.mxu0 0.0
    %375 = vmatpush1.msra.mxu0 0.0
    %376 = vmatprep.subr.mxu0 0.0
    %377 = vmatpush1.msra.mxu0 0.0
    %378 = vmatprep.subr.mxu0 0.0
    %379 = vmatpush1.msra.mxu0 0.0
    %380 = vmatprep.subr.mxu0 0.0
    %381 = vmatpush1.msra.mxu0 0.0
    %382 = vmatprep.subr.mxu0 0.0
    %383 = vmatpush1.msra.mxu0 0.0
    %384 = vmatprep.subr.mxu0 0.0
    %385 = vmatpush1.msra.mxu0 0.0
    %386 = vmatprep.subr.mxu0 0.0
    %387 = vmatpush1.msra.mxu0 0.0
    %388 = vmatprep.subr.mxu0 0.0
    %389 = vmatpush1.msra.mxu0 0.0
    %390 = vmatprep.subr.mxu0 0.0
    %391 = vmatpush1.msra.mxu0 0.0
    %392 = vmatprep.subr.mxu0 0.0
    %393 = vmatpush1.msra.mxu0 0.0
    %394 = vmatprep.subr.mxu0 0.0
    %395 = vmatpush1.msra.mxu0 0.0
    %396 = vmatprep.subr.mxu0 0.0
    %397 = vmatpush1.msra.mxu0 0.0
    %398 = vmatprep.subr.mxu0 0.0
    %v399 = vand.u32 %v33, 4294901760
    %v400 = vsub.f32 %v33, %v399
    %v401 = vand.u32 %v400, 4294901760
    %402 = vmatpush1.msra.mxu0 %v401
    %403 = vmatprep.subr.mxu0 0.0
    %v404 = vand.u32 %v32, 4294901760
    %v405 = vsub.f32 %v32, %v404
    %v406 = vand.u32 %v405, 4294901760
    %407 = vmatpush1.msra.mxu0 %v406
    %408 = vmatprep.subr.mxu0 0.0
    %v409 = vand.u32 %v31, 4294901760
    %v410 = vsub.f32 %v31, %v409
    %v411 = vand.u32 %v410, 4294901760
    %412 = vmatpush1.msra.mxu0 %v411
    %413 = vmatprep.subr.mxu0 0.0
    %v414 = vand.u32 %v30, 4294901760
    %v415 = vsub.f32 %v30, %v414
    %v416 = vand.u32 %v415, 4294901760
    %417 = vmatpush1.msra.mxu0 %v416
    %418 = vmatprep.subr.mxu0 0.0
    %419 = vmatpush2.msra.mxu0 0.0
    %420 = vmatprep.subr.mxu0 0.0
    %421 = vmatpush2.msra.mxu0 0.0
    %422 = vmatprep.subr.mxu0 0.0
    %423 = vmatpush2.msra.mxu0 0.0
    %424 = vmatprep.subr.mxu0 0.0
    %425 = vmatpush2.msra.mxu0 0.0
    %426 = vmatprep.subr.mxu0 0.0
    %427 = vmatpush2.msra.mxu0 0.0
    %428 = vmatprep.subr.mxu0 0.0
    %429 = vmatpush2.msra.mxu0 0.0
    %430 = vmatprep.subr.mxu0 0.0
    %431 = vmatpush2.msra.mxu0 0.0
    %432 = vmatprep.subr.mxu0 0.0
    %433 = vmatpush2.msra.mxu0 0.0
    %434 = vmatprep.subr.mxu0 0.0
    %435 = vmatpush2.msra.mxu0 0.0
    %436 = vmatprep.subr.mxu0 0.0
    %437 = vmatpush2.msra.mxu0 0.0
    %438 = vmatprep.subr.mxu0 0.0
    %439 = vmatpush2.msra.mxu0 0.0
    %440 = vmatprep.subr.mxu0 0.0
    %441 = vmatpush2.msra.mxu0 0.0
    %442 = vmatprep.subr.mxu0 0.0
    %443 = vmatpush2.msra.mxu0 0.0
    %444 = vmatprep.subr.mxu0 0.0
    %445 = vmatpush2.msra.mxu0 0.0
    %446 = vmatprep.subr.mxu0 0.0
    %447 = vmatpush2.msra.mxu0 0.0
    %448 = vmatprep.subr.mxu0 0.0
    %449 = vmatpush2.msra.mxu0 0.0
    %450 = vmatprep.mubr.f32.mxu0 0.0
    %v451 = vand.u32 %v45, 4294901760
    %452 = vmatmul.mubr.f32.gmra.mxu0 %v451
    %v453 = vpop.f32.mrf.mxu0
    %v454 = vadd.f32 %v371, %v453
    %v455 = vpop.f32.mrf.mxu0
    %456 = vdwg.mxu0
    %457 = vmatprep.subr.mxu0 0.0
    %458 = vmatpush1.msra.mxu0 0.0
    %459 = vmatprep.subr.mxu0 0.0
    %460 = vmatpush1.msra.mxu0 0.0
    %461 = vmatprep.subr.mxu0 0.0
    %462 = vmatpush1.msra.mxu0 0.0
    %463 = vmatprep.subr.mxu0 0.0
    %464 = vmatpush1.msra.mxu0 0.0
    %465 = vmatprep.subr.mxu0 0.0
    %466 = vmatpush1.msra.mxu0 0.0
    %467 = vmatprep.subr.mxu0 0.0
    %468 = vmatpush1.msra.mxu0 0.0
    %469 = vmatprep.subr.mxu0 0.0
    %470 = vmatpush1.msra.mxu0 0.0
    %471 = vmatprep.subr.mxu0 0.0
    %472 = vmatpush1.msra.mxu0 0.0
    %473 = vmatprep.subr.mxu0 0.0
    %474 = vmatpush1.msra.mxu0 0.0
    %475 = vmatprep.subr.mxu0 0.0
    %476 = vmatpush1.msra.mxu0 0.0
    %477 = vmatprep.subr.mxu0 0.0
    %478 = vmatpush1.msra.mxu0 0.0
    %479 = vmatprep.subr.mxu0 0.0
    %480 = vmatpush1.msra.mxu0 0.0
    %481 = vmatprep.subr.mxu0 0.0
    %v482 = vand.u32 %v33, 4294901760
    %483 = vmatpush1.msra.mxu0 %v482
    %484 = vmatprep.subr.mxu0 0.0
    %v485 = vand.u32 %v32, 4294901760
    %486 = vmatpush1.msra.mxu0 %v485
    %487 = vmatprep.subr.mxu0 0.0
    %v488 = vand.u32 %v31, 4294901760
    %489 = vmatpush1.msra.mxu0 %v488
    %490 = vmatprep.subr.mxu0 0.0
    %v491 = vand.u32 %v30, 4294901760
    %492 = vmatpush1.msra.mxu0 %v491
    %493 = vmatprep.subr.mxu0 0.0
    %494 = vmatpush2.msra.mxu0 0.0
    %495 = vmatprep.subr.mxu0 0.0
    %496 = vmatpush2.msra.mxu0 0.0
    %497 = vmatprep.subr.mxu0 0.0
    %498 = vmatpush2.msra.mxu0 0.0
    %499 = vmatprep.subr.mxu0 0.0
    %500 = vmatpush2.msra.mxu0 0.0
    %501 = vmatprep.subr.mxu0 0.0
    %502 = vmatpush2.msra.mxu0 0.0
    %503 = vmatprep.subr.mxu0 0.0
    %504 = vmatpush2.msra.mxu0 0.0
    %505 = vmatprep.subr.mxu0 0.0
    %506 = vmatpush2.msra.mxu0 0.0
    %507 = vmatprep.subr.mxu0 0.0
    %508 = vmatpush2.msra.mxu0 0.0
    %509 = vmatprep.subr.mxu0 0.0
    %510 = vmatpush2.msra.mxu0 0.0
    %511 = vmatprep.subr.mxu0 0.0
    %512 = vmatpush2.msra.mxu0 0.0
    %513 = vmatprep.subr.mxu0 0.0
    %514 = vmatpush2.msra.mxu0 0.0
    %515 = vmatprep.subr.mxu0 0.0
    %516 = vmatpush2.msra.mxu0 0.0
    %517 = vmatprep.subr.mxu0 0.0
    %518 = vmatpush2.msra.mxu0 0.0
    %519 = vmatprep.subr.mxu0 0.0
    %520 = vmatpush2.msra.mxu0 0.0
    %521 = vmatprep.subr.mxu0 0.0
    %522 = vmatpush2.msra.mxu0 0.0
    %523 = vmatprep.subr.mxu0 0.0
    %524 = vmatpush2.msra.mxu0 0.0
    %525 = vmatprep.mubr.f32.mxu0 0.0
    %v526 = vand.u32 %v45, 4294901760
    %527 = vmatmul.mubr.f32.gmra.mxu0 %v526
    %v528 = vpop.f32.mrf.mxu0
    %v529 = vadd.f32 %v454, %v528
    %v530 = vpop.f32.mrf.mxu0
    %531 = vdwg.mxu0
    %532 = vset.pattern.permute.xlu0 1
    %533 = vperm.xlu0 %532, %v29
    %v534 = vpop.permute.xlu0 %533
    %vm535 = vcmp.eq.s32.totalorder %v534, %v36
    %v536 = vsel %vm535, 1, 0
    %v537 = vcvt.s32.f32 %v536
    %v539 = vsel %vm43, %v537, 0
    %541 = vmatprep.subr.mxu0 0.0
    %542 = vmatpush1.msra.mxu0 0.0
    %543 = vmatprep.subr.mxu0 0.0
    %544 = vmatpush1.msra.mxu0 0.0
    %545 = vmatprep.subr.mxu0 0.0
    %546 = vmatpush1.msra.mxu0 0.0
    %547 = vmatprep.subr.mxu0 0.0
    %548 = vmatpush1.msra.mxu0 0.0
    %549 = vmatprep.subr.mxu0 0.0
    %550 = vmatpush1.msra.mxu0 0.0
    %551 = vmatprep.subr.mxu0 0.0
    %552 = vmatpush1.msra.mxu0 0.0
    %553 = vmatprep.subr.mxu0 0.0
    %554 = vmatpush1.msra.mxu0 0.0
    %555 = vmatprep.subr.mxu0 0.0
    %556 = vmatpush1.msra.mxu0 0.0
    %557 = vmatprep.subr.mxu0 0.0
    %558 = vmatpush1.msra.mxu0 0.0
    %559 = vmatprep.subr.mxu0 0.0
    %560 = vmatpush1.msra.mxu0 0.0
    %561 = vmatprep.subr.mxu0 0.0
    %562 = vmatpush1.msra.mxu0 0.0
    %563 = vmatprep.subr.mxu0 0.0
    %564 = vmatpush1.msra.mxu0 0.0
    %565 = vmatprep.subr.mxu0 0.0
    %v566 = vand.u32 %v33, 4294901760
    %567 = vmatpush1.msra.mxu0 %v566
    %568 = vmatprep.subr.mxu0 0.0
    %v569 = vand.u32 %v32, 4294901760
    %570 = vmatpush1.msra.mxu0 %v569
    %571 = vmatprep.subr.mxu0 0.0
    %v572 = vand.u32 %v31, 4294901760
    %573 = vmatpush1.msra.mxu0 %v572
    %574 = vmatprep.subr.mxu0 0.0
    %v575 = vand.u32 %v30, 4294901760
    %576 = vmatpush1.msra.mxu0 %v575
    %577 = vmatprep.subr.mxu0 0.0
    %578 = vmatpush2.msra.mxu0 0.0
    %579 = vmatprep.subr.mxu0 0.0
    %580 = vmatpush2.msra.mxu0 0.0
    %581 = vmatprep.subr.mxu0 0.0
    %582 = vmatpush2.msra.mxu0 0.0
    %583 = vmatprep.subr.mxu0 0.0
    %584 = vmatpush2.msra.mxu0 0.0
    %585 = vmatprep.subr.mxu0 0.0
    %586 = vmatpush2.msra.mxu0 0.0
    %587 = vmatprep.subr.mxu0 0.0
    %588 = vmatpush2.msra.mxu0 0.0
    %589 = vmatprep.subr.mxu0 0.0
    %590 = vmatpush2.msra.mxu0 0.0
    %591 = vmatprep.subr.mxu0 0.0
    %592 = vmatpush2.msra.mxu0 0.0
    %593 = vmatprep.subr.mxu0 0.0
    %594 = vmatpush2.msra.mxu0 0.0
    %595 = vmatprep.subr.mxu0 0.0
    %596 = vmatpush2.msra.mxu0 0.0
    %597 = vmatprep.subr.mxu0 0.0
    %598 = vmatpush2.msra.mxu0 0.0
    %599 = vmatprep.subr.mxu0 0.0
    %600 = vmatpush2.msra.mxu0 0.0
    %601 = vmatprep.subr.mxu0 0.0
    %602 = vmatpush2.msra.mxu0 0.0
    %603 = vmatprep.subr.mxu0 0.0
    %604 = vmatpush2.msra.mxu0 0.0
    %605 = vmatprep.subr.mxu0 0.0
    %606 = vmatpush2.msra.mxu0 0.0
    %607 = vmatprep.subr.mxu0 0.0
    %608 = vmatpush2.msra.mxu0 0.0
    %609 = vmatprep.mubr.f32.mxu0 0.0
    %v610 = vand.u32 %v539, 4294901760
    %v611 = vsub.f32 %v539, %v610
    %v612 = vand.u32 %v611, 4294901760
    %v613 = vsub.f32 %v611, %v612
    %v614 = vand.u32 %v613, 4294901760
    %615 = vmatmul.mubr.f32.gmra.mxu0 %v614
    %v616 = vpop.f32.mrf.mxu0
    %v617 = vadd.f32 0.0, %v616
    %v618 = vpop.f32.mrf.mxu0
    %619 = vdwg.mxu0
    %620 = vmatprep.subr.mxu0 0.0
    %621 = vmatpush1.msra.mxu0 0.0
    %622 = vmatprep.subr.mxu0 0.0
    %623 = vmatpush1.msra.mxu0 0.0
    %624 = vmatprep.subr.mxu0 0.0
    %625 = vmatpush1.msra.mxu0 0.0
    %626 = vmatprep.subr.mxu0 0.0
    %627 = vmatpush1.msra.mxu0 0.0
    %628 = vmatprep.subr.mxu0 0.0
    %629 = vmatpush1.msra.mxu0 0.0
    %630 = vmatprep.subr.mxu0 0.0
    %631 = vmatpush1.msra.mxu0 0.0
    %632 = vmatprep.subr.mxu0 0.0
    %633 = vmatpush1.msra.mxu0 0.0
    %634 = vmatprep.subr.mxu0 0.0
    %635 = vmatpush1.msra.mxu0 0.0
    %636 = vmatprep.subr.mxu0 0.0
    %637 = vmatpush1.msra.mxu0 0.0
    %638 = vmatprep.subr.mxu0 0.0
    %639 = vmatpush1.msra.mxu0 0.0
    %640 = vmatprep.subr.mxu0 0.0
    %641 = vmatpush1.msra.mxu0 0.0
    %642 = vmatprep.subr.mxu0 0.0
    %643 = vmatpush1.msra.mxu0 0.0
    %644 = vmatprep.subr.mxu0 0.0
    %v645 = vand.u32 %v33, 4294901760
    %v646 = vsub.f32 %v33, %v645
    %v647 = vand.u32 %v646, 4294901760
    %v648 = vsub.f32 %v646, %v647
    %v649 = vand.u32 %v648, 4294901760
    %650 = vmatpush1.msra.mxu0 %v649
    %651 = vmatprep.subr.mxu0 0.0
    %v652 = vand.u32 %v32, 4294901760
    %v653 = vsub.f32 %v32, %v652
    %v654 = vand.u32 %v653, 4294901760
    %v655 = vsub.f32 %v653, %v654
    %v656 = vand.u32 %v655, 4294901760
    %657 = vmatpush1.msra.mxu0 %v656
    %658 = vmatprep.subr.mxu0 0.0
    %v659 = vand.u32 %v31, 4294901760
    %v660 = vsub.f32 %v31, %v659
    %v661 = vand.u32 %v660, 4294901760
    %v662 = vsub.f32 %v660, %v661
    %v663 = vand.u32 %v662, 4294901760
    %664 = vmatpush1.msra.mxu0 %v663
    %665 = vmatprep.subr.mxu0 0.0
    %v666 = vand.u32 %v30, 4294901760
    %v667 = vsub.f32 %v30, %v666
    %v668 = vand.u32 %v667, 4294901760
    %v669 = vsub.f32 %v667, %v668
    %v670 = vand.u32 %v669, 4294901760
    %671 = vmatpush1.msra.mxu0 %v670
    %672 = vmatprep.subr.mxu0 0.0
    %673 = vmatpush2.msra.mxu0 0.0
    %674 = vmatprep.subr.mxu0 0.0
    %675 = vmatpush2.msra.mxu0 0.0
    %676 = vmatprep.subr.mxu0 0.0
    %677 = vmatpush2.msra.mxu0 0.0
    %678 = vmatprep.subr.mxu0 0.0
    %679 = vmatpush2.msra.mxu0 0.0
    %680 = vmatprep.subr.mxu0 0.0
    %681 = vmatpush2.msra.mxu0 0.0
    %682 = vmatprep.subr.mxu0 0.0
    %683 = vmatpush2.msra.mxu0 0.0
    %684 = vmatprep.subr.mxu0 0.0
    %685 = vmatpush2.msra.mxu0 0.0
    %686 = vmatprep.subr.mxu0 0.0
    %687 = vmatpush2.msra.mxu0 0.0
    %688 = vmatprep.subr.mxu0 0.0
    %689 = vmatpush2.msra.mxu0 0.0
    %690 = vmatprep.subr.mxu0 0.0
    %691 = vmatpush2.msra.mxu0 0.0
    %692 = vmatprep.subr.mxu0 0.0
    %693 = vmatpush2.msra.mxu0 0.0
    %694 = vmatprep.subr.mxu0 0.0
    %695 = vmatpush2.msra.mxu0 0.0
    %696 = vmatprep.subr.mxu0 0.0
    %697 = vmatpush2.msra.mxu0 0.0
    %698 = vmatprep.subr.mxu0 0.0
    %699 = vmatpush2.msra.mxu0 0.0
    %700 = vmatprep.subr.mxu0 0.0
    %701 = vmatpush2.msra.mxu0 0.0
    %702 = vmatprep.subr.mxu0 0.0
    %703 = vmatpush2.msra.mxu0 0.0
    %704 = vmatprep.mubr.f32.mxu0 0.0
    %v705 = vand.u32 %v539, 4294901760
    %706 = vmatmul.mubr.f32.gmra.mxu0 %v705
    %v707 = vpop.f32.mrf.mxu0
    %v708 = vadd.f32 %v617, %v707
    %v709 = vpop.f32.mrf.mxu0
    %710 = vdwg.mxu0
    %711 = vmatprep.subr.mxu0 0.0
    %712 = vmatpush1.msra.mxu0 0.0
    %713 = vmatprep.subr.mxu0 0.0
    %714 = vmatpush1.msra.mxu0 0.0
    %715 = vmatprep.subr.mxu0 0.0
    %716 = vmatpush1.msra.mxu0 0.0
    %717 = vmatprep.subr.mxu0 0.0
    %718 = vmatpush1.msra.mxu0 0.0
    %719 = vmatprep.subr.mxu0 0.0
    %720 = vmatpush1.msra.mxu0 0.0
    %721 = vmatprep.subr.mxu0 0.0
    %722 = vmatpush1.msra.mxu0 0.0
    %723 = vmatprep.subr.mxu0 0.0
    %724 = vmatpush1.msra.mxu0 0.0
    %725 = vmatprep.subr.mxu0 0.0
    %726 = vmatpush1.msra.mxu0 0.0
    %727 = vmatprep.subr.mxu0 0.0
    %728 = vmatpush1.msra.mxu0 0.0
    %729 = vmatprep.subr.mxu0 0.0
    %730 = vmatpush1.msra.mxu0 0.0
    %731 = vmatprep.subr.mxu0 0.0
    %732 = vmatpush1.msra.mxu0 0.0
    %733 = vmatprep.subr.mxu0 0.0
    %734 = vmatpush1.msra.mxu0 0.0
    %735 = vmatprep.subr.mxu0 0.0
    %v736 = vand.u32 %v33, 4294901760
    %v737 = vsub.f32 %v33, %v736
    %738 = vmatpush1.msra.mxu0 %v737
    %739 = vmatprep.subr.mxu0 0.0
    %v740 = vand.u32 %v32, 4294901760
    %v741 = vsub.f32 %v32, %v740
    %742 = vmatpush1.msra.mxu0 %v741
    %743 = vmatprep.subr.mxu0 0.0
    %v744 = vand.u32 %v31, 4294901760
    %v745 = vsub.f32 %v31, %v744
    %746 = vmatpush1.msra.mxu0 %v745
    %747 = vmatprep.subr.mxu0 0.0
    %v748 = vand.u32 %v30, 4294901760
    %v749 = vsub.f32 %v30, %v748
    %750 = vmatpush1.msra.mxu0 %v749
    %751 = vmatprep.subr.mxu0 0.0
    %752 = vmatpush2.msra.mxu0 0.0
    %753 = vmatprep.subr.mxu0 0.0
    %754 = vmatpush2.msra.mxu0 0.0
    %755 = vmatprep.subr.mxu0 0.0
    %756 = vmatpush2.msra.mxu0 0.0
    %757 = vmatprep.subr.mxu0 0.0
    %758 = vmatpush2.msra.mxu0 0.0
    %759 = vmatprep.subr.mxu0 0.0
    %760 = vmatpush2.msra.mxu0 0.0
    %761 = vmatprep.subr.mxu0 0.0
    %762 = vmatpush2.msra.mxu0 0.0
    %763 = vmatprep.subr.mxu0 0.0
    %764 = vmatpush2.msra.mxu0 0.0
    %765 = vmatprep.subr.mxu0 0.0
    %766 = vmatpush2.msra.mxu0 0.0
    %767 = vmatprep.subr.mxu0 0.0
    %768 = vmatpush2.msra.mxu0 0.0
    %769 = vmatprep.subr.mxu0 0.0
    %770 = vmatpush2.msra.mxu0 0.0
    %771 = vmatprep.subr.mxu0 0.0
    %772 = vmatpush2.msra.mxu0 0.0
    %773 = vmatprep.subr.mxu0 0.0
    %774 = vmatpush2.msra.mxu0 0.0
    %775 = vmatprep.subr.mxu0 0.0
    %776 = vmatpush2.msra.mxu0 0.0
    %777 = vmatprep.subr.mxu0 0.0
    %778 = vmatpush2.msra.mxu0 0.0
    %779 = vmatprep.subr.mxu0 0.0
    %780 = vmatpush2.msra.mxu0 0.0
    %781 = vmatprep.subr.mxu0 0.0
    %782 = vmatpush2.msra.mxu0 0.0
    %783 = vmatprep.mubr.f32.mxu0 0.0
    %v784 = vand.u32 %v539, 4294901760
    %v785 = vsub.f32 %v539, %v784
    %786 = vmatmul.mubr.f32.gmra.mxu0 %v785
    %v787 = vpop.f32.mrf.mxu0
    %v788 = vadd.f32 %v708, %v787
    %v789 = vpop.f32.mrf.mxu0
    %790 = vdwg.mxu0
    %791 = vmatprep.subr.mxu0 0.0
    %792 = vmatpush1.msra.mxu0 0.0
    %793 = vmatprep.subr.mxu0 0.0
    %794 = vmatpush1.msra.mxu0 0.0
    %795 = vmatprep.subr.mxu0 0.0
    %796 = vmatpush1.msra.mxu0 0.0
    %797 = vmatprep.subr.mxu0 0.0
    %798 = vmatpush1.msra.mxu0 0.0
    %799 = vmatprep.subr.mxu0 0.0
    %800 = vmatpush1.msra.mxu0 0.0
    %801 = vmatprep.subr.mxu0 0.0
    %802 = vmatpush1.msra.mxu0 0.0
    %803 = vmatprep.subr.mxu0 0.0
    %804 = vmatpush1.msra.mxu0 0.0
    %805 = vmatprep.subr.mxu0 0.0
    %806 = vmatpush1.msra.mxu0 0.0
    %807 = vmatprep.subr.mxu0 0.0
    %808 = vmatpush1.msra.mxu0 0.0
    %809 = vmatprep.subr.mxu0 0.0
    %810 = vmatpush1.msra.mxu0 0.0
    %811 = vmatprep.subr.mxu0 0.0
    %812 = vmatpush1.msra.mxu0 0.0
    %813 = vmatprep.subr.mxu0 0.0
    %814 = vmatpush1.msra.mxu0 0.0
    %815 = vmatprep.subr.mxu0 0.0
    %v816 = vand.u32 %v33, 4294901760
    %817 = vmatpush1.msra.mxu0 %v816
    %818 = vmatprep.subr.mxu0 0.0
    %v819 = vand.u32 %v32, 4294901760
    %820 = vmatpush1.msra.mxu0 %v819
    %821 = vmatprep.subr.mxu0 0.0
    %v822 = vand.u32 %v31, 4294901760
    %823 = vmatpush1.msra.mxu0 %v822
    %824 = vmatprep.subr.mxu0 0.0
    %v825 = vand.u32 %v30, 4294901760
    %826 = vmatpush1.msra.mxu0 %v825
    %827 = vmatprep.subr.mxu0 0.0
    %828 = vmatpush2.msra.mxu0 0.0
    %829 = vmatprep.subr.mxu0 0.0
    %830 = vmatpush2.msra.mxu0 0.0
    %831 = vmatprep.subr.mxu0 0.0
    %832 = vmatpush2.msra.mxu0 0.0
    %833 = vmatprep.subr.mxu0 0.0
    %834 = vmatpush2.msra.mxu0 0.0
    %835 = vmatprep.subr.mxu0 0.0
    %836 = vmatpush2.msra.mxu0 0.0
    %837 = vmatprep.subr.mxu0 0.0
    %838 = vmatpush2.msra.mxu0 0.0
    %839 = vmatprep.subr.mxu0 0.0
    %840 = vmatpush2.msra.mxu0 0.0
    %841 = vmatprep.subr.mxu0 0.0
    %842 = vmatpush2.msra.mxu0 0.0
    %843 = vmatprep.subr.mxu0 0.0
    %844 = vmatpush2.msra.mxu0 0.0
    %845 = vmatprep.subr.mxu0 0.0
    %846 = vmatpush2.msra.mxu0 0.0
    %847 = vmatprep.subr.mxu0 0.0
    %848 = vmatpush2.msra.mxu0 0.0
    %849 = vmatprep.subr.mxu0 0.0
    %850 = vmatpush2.msra.mxu0 0.0
    %851 = vmatprep.subr.mxu0 0.0
    %852 = vmatpush2.msra.mxu0 0.0
    %853 = vmatprep.subr.mxu0 0.0
    %854 = vmatpush2.msra.mxu0 0.0
    %855 = vmatprep.subr.mxu0 0.0
    %856 = vmatpush2.msra.mxu0 0.0
    %857 = vmatprep.subr.mxu0 0.0
    %858 = vmatpush2.msra.mxu0 0.0
    %859 = vmatprep.mubr.f32.mxu0 0.0
    %v860 = vand.u32 %v539, 4294901760
    %v861 = vsub.f32 %v539, %v860
    %v862 = vand.u32 %v861, 4294901760
    %863 = vmatmul.mubr.f32.gmra.mxu0 %v862
    %v864 = vpop.f32.mrf.mxu0
    %v865 = vadd.f32 %v788, %v864
    %v866 = vpop.f32.mrf.mxu0
    %867 = vdwg.mxu0
    %868 = vmatprep.subr.mxu0 0.0
    %869 = vmatpush1.msra.mxu0 0.0
    %870 = vmatprep.subr.mxu0 0.0
    %871 = vmatpush1.msra.mxu0 0.0
    %872 = vmatprep.subr.mxu0 0.0
    %873 = vmatpush1.msra.mxu0 0.0
    %874 = vmatprep.subr.mxu0 0.0
    %875 = vmatpush1.msra.mxu0 0.0
    %876 = vmatprep.subr.mxu0 0.0
    %877 = vmatpush1.msra.mxu0 0.0
    %878 = vmatprep.subr.mxu0 0.0
    %879 = vmatpush1.msra.mxu0 0.0
    %880 = vmatprep.subr.mxu0 0.0
    %881 = vmatpush1.msra.mxu0 0.0
    %882 = vmatprep.subr.mxu0 0.0
    %883 = vmatpush1.msra.mxu0 0.0
    %884 = vmatprep.subr.mxu0 0.0
    %885 = vmatpush1.msra.mxu0 0.0
    %886 = vmatprep.subr.mxu0 0.0
    %887 = vmatpush1.msra.mxu0 0.0
    %888 = vmatprep.subr.mxu0 0.0
    %889 = vmatpush1.msra.mxu0 0.0
    %890 = vmatprep.subr.mxu0 0.0
    %891 = vmatpush1.msra.mxu0 0.0
    %892 = vmatprep.subr.mxu0 0.0
    %v893 = vand.u32 %v33, 4294901760
    %v894 = vsub.f32 %v33, %v893
    %v895 = vand.u32 %v894, 4294901760
    %896 = vmatpush1.msra.mxu0 %v895
    %897 = vmatprep.subr.mxu0 0.0
    %v898 = vand.u32 %v32, 4294901760
    %v899 = vsub.f32 %v32, %v898
    %v900 = vand.u32 %v899, 4294901760
    %901 = vmatpush1.msra.mxu0 %v900
    %902 = vmatprep.subr.mxu0 0.0
    %v903 = vand.u32 %v31, 4294901760
    %v904 = vsub.f32 %v31, %v903
    %v905 = vand.u32 %v904, 4294901760
    %906 = vmatpush1.msra.mxu0 %v905
    %907 = vmatprep.subr.mxu0 0.0
    %v908 = vand.u32 %v30, 4294901760
    %v909 = vsub.f32 %v30, %v908
    %v910 = vand.u32 %v909, 4294901760
    %911 = vmatpush1.msra.mxu0 %v910
    %912 = vmatprep.subr.mxu0 0.0
    %913 = vmatpush2.msra.mxu0 0.0
    %914 = vmatprep.subr.mxu0 0.0
    %915 = vmatpush2.msra.mxu0 0.0
    %916 = vmatprep.subr.mxu0 0.0
    %917 = vmatpush2.msra.mxu0 0.0
    %918 = vmatprep.subr.mxu0 0.0
    %919 = vmatpush2.msra.mxu0 0.0
    %920 = vmatprep.subr.mxu0 0.0
    %921 = vmatpush2.msra.mxu0 0.0
    %922 = vmatprep.subr.mxu0 0.0
    %923 = vmatpush2.msra.mxu0 0.0
    %924 = vmatprep.subr.mxu0 0.0
    %925 = vmatpush2.msra.mxu0 0.0
    %926 = vmatprep.subr.mxu0 0.0
    %927 = vmatpush2.msra.mxu0 0.0
    %928 = vmatprep.subr.mxu0 0.0
    %929 = vmatpush2.msra.mxu0 0.0
    %930 = vmatprep.subr.mxu0 0.0
    %931 = vmatpush2.msra.mxu0 0.0
    %932 = vmatprep.subr.mxu0 0.0
    %933 = vmatpush2.msra.mxu0 0.0
    %934 = vmatprep.subr.mxu0 0.0
    %935 = vmatpush2.msra.mxu0 0.0
    %936 = vmatprep.subr.mxu0 0.0
    %937 = vmatpush2.msra.mxu0 0.0
    %938 = vmatprep.subr.mxu0 0.0
    %939 = vmatpush2.msra.mxu0 0.0
    %940 = vmatprep.subr.mxu0 0.0
    %941 = vmatpush2.msra.mxu0 0.0
    %942 = vmatprep.subr.mxu0 0.0
    %943 = vmatpush2.msra.mxu0 0.0
    %944 = vmatprep.mubr.f32.mxu0 0.0
    %v945 = vand.u32 %v539, 4294901760
    %946 = vmatmul.mubr.f32.gmra.mxu0 %v945
    %v947 = vpop.f32.mrf.mxu0
    %v948 = vadd.f32 %v865, %v947
    %v949 = vpop.f32.mrf.mxu0
    %950 = vdwg.mxu0
    %951 = vmatprep.subr.mxu0 0.0
    %952 = vmatpush1.msra.mxu0 0.0
    %953 = vmatprep.subr.mxu0 0.0
    %954 = vmatpush1.msra.mxu0 0.0
    %955 = vmatprep.subr.mxu0 0.0
    %956 = vmatpush1.msra.mxu0 0.0
    %957 = vmatprep.subr.mxu0 0.0
    %958 = vmatpush1.msra.mxu0 0.0
    %959 = vmatprep.subr.mxu0 0.0
    %960 = vmatpush1.msra.mxu0 0.0
    %961 = vmatprep.subr.mxu0 0.0
    %962 = vmatpush1.msra.mxu0 0.0
    %963 = vmatprep.subr.mxu0 0.0
    %964 = vmatpush1.msra.mxu0 0.0
    %965 = vmatprep.subr.mxu0 0.0
    %966 = vmatpush1.msra.mxu0 0.0
    %967 = vmatprep.subr.mxu0 0.0
    %968 = vmatpush1.msra.mxu0 0.0
    %969 = vmatprep.subr.mxu0 0.0
    %970 = vmatpush1.msra.mxu0 0.0
    %971 = vmatprep.subr.mxu0 0.0
    %972 = vmatpush1.msra.mxu0 0.0
    %973 = vmatprep.subr.mxu0 0.0
    %974 = vmatpush1.msra.mxu0 0.0
    %975 = vmatprep.subr.mxu0 0.0
    %v976 = vand.u32 %v33, 4294901760
    %977 = vmatpush1.msra.mxu0 %v976
    %978 = vmatprep.subr.mxu0 0.0
    %v979 = vand.u32 %v32, 4294901760
    %980 = vmatpush1.msra.mxu0 %v979
    %981 = vmatprep.subr.mxu0 0.0
    %v982 = vand.u32 %v31, 4294901760
    %983 = vmatpush1.msra.mxu0 %v982
    %984 = vmatprep.subr.mxu0 0.0
    %v985 = vand.u32 %v30, 4294901760
    %986 = vmatpush1.msra.mxu0 %v985
    %987 = vmatprep.subr.mxu0 0.0
    %988 = vmatpush2.msra.mxu0 0.0
    %989 = vmatprep.subr.mxu0 0.0
    %990 = vmatpush2.msra.mxu0 0.0
    %991 = vmatprep.subr.mxu0 0.0
    %992 = vmatpush2.msra.mxu0 0.0
    %993 = vmatprep.subr.mxu0 0.0
    %994 = vmatpush2.msra.mxu0 0.0
    %995 = vmatprep.subr.mxu0 0.0
    %996 = vmatpush2.msra.mxu0 0.0
    %997 = vmatprep.subr.mxu0 0.0
    %998 = vmatpush2.msra.mxu0 0.0
    %999 = vmatprep.subr.mxu0 0.0
    %1000 = vmatpush2.msra.mxu0 0.0
    %1001 = vmatprep.subr.mxu0 0.0
    %1002 = vmatpush2.msra.mxu0 0.0
    %1003 = vmatprep.subr.mxu0 0.0
    %1004 = vmatpush2.msra.mxu0 0.0
    %1005 = vmatprep.subr.mxu0 0.0
    %1006 = vmatpush2.msra.mxu0 0.0
    %1007 = vmatprep.subr.mxu0 0.0
    %1008 = vmatpush2.msra.mxu0 0.0
    %1009 = vmatprep.subr.mxu0 0.0
    %1010 = vmatpush2.msra.mxu0 0.0
    %1011 = vmatprep.subr.mxu0 0.0
    %1012 = vmatpush2.msra.mxu0 0.0
    %1013 = vmatprep.subr.mxu0 0.0
    %1014 = vmatpush2.msra.mxu0 0.0
    %1015 = vmatprep.subr.mxu0 0.0
    %1016 = vmatpush2.msra.mxu0 0.0
    %1017 = vmatprep.subr.mxu0 0.0
    %1018 = vmatpush2.msra.mxu0 0.0
    %1019 = vmatprep.mubr.f32.mxu0 0.0
    %v1020 = vand.u32 %v539, 4294901760
    %1021 = vmatmul.mubr.f32.gmra.mxu0 %v1020
    %v1022 = vpop.f32.mrf.mxu0
    %v1023 = vadd.f32 %v948, %v1022
    %v1024 = vpop.f32.mrf.mxu0
    %1025 = vdwg.mxu0
    %1026 = vset.pattern.permute.xlu0 2
    %1027 = vperm.xlu0 %1026, %v29
    %v1028 = vpop.permute.xlu0 %1027
    %vm1029 = vcmp.eq.s32.totalorder %v1028, %v36
    %v1030 = vsel %vm1029, 1, 0
    %v1031 = vcvt.s32.f32 %v1030
    %vm1032 = vcmask 64512
    %v1034 = vsel %vm1032, %v1031, 0
    %1036 = vmatprep.subr.mxu0 0.0
    %1037 = vmatpush1.msra.mxu0 0.0
    %1038 = vmatprep.subr.mxu0 0.0
    %1039 = vmatpush1.msra.mxu0 0.0
    %1040 = vmatprep.subr.mxu0 0.0
    %1041 = vmatpush1.msra.mxu0 0.0
    %1042 = vmatprep.subr.mxu0 0.0
    %1043 = vmatpush1.msra.mxu0 0.0
    %1044 = vmatprep.subr.mxu0 0.0
    %1045 = vmatpush1.msra.mxu0 0.0
    %1046 = vmatprep.subr.mxu0 0.0
    %1047 = vmatpush1.msra.mxu0 0.0
    %1048 = vmatprep.subr.mxu0 0.0
    %1049 = vmatpush1.msra.mxu0 0.0
    %1050 = vmatprep.subr.mxu0 0.0
    %1051 = vmatpush1.msra.mxu0 0.0
    %1052 = vmatprep.subr.mxu0 0.0
    %1053 = vmatpush1.msra.mxu0 0.0
    %1054 = vmatprep.subr.mxu0 0.0
    %1055 = vmatpush1.msra.mxu0 0.0
    %1056 = vmatprep.subr.mxu0 0.0
    %1057 = vmatpush1.msra.mxu0 0.0
    %1058 = vmatprep.subr.mxu0 0.0
    %1059 = vmatpush1.msra.mxu0 0.0
    %1060 = vmatprep.subr.mxu0 0.0
    %1061 = vmatpush1.msra.mxu0 0.0
    %1062 = vmatprep.subr.mxu0 0.0
    %1063 = vmatpush1.msra.mxu0 0.0
    %1064 = vmatprep.subr.mxu0 0.0
    %1065 = vmatpush1.msra.mxu0 0.0
    %1066 = vmatprep.subr.mxu0 0.0
    %v1067 = vand.u32 %v34, 4294901760
    %1068 = vmatpush1.msra.mxu0 %v1067
    %1069 = vmatprep.subr.mxu0 0.0
    %1070 = vmatpush2.msra.mxu0 0.0
    %1071 = vmatprep.subr.mxu0 0.0
    %1072 = vmatpush2.msra.mxu0 0.0
    %1073 = vmatprep.subr.mxu0 0.0
    %1074 = vmatpush2.msra.mxu0 0.0
    %1075 = vmatprep.subr.mxu0 0.0
    %1076 = vmatpush2.msra.mxu0 0.0
    %1077 = vmatprep.subr.mxu0 0.0
    %1078 = vmatpush2.msra.mxu0 0.0
    %1079 = vmatprep.subr.mxu0 0.0
    %1080 = vmatpush2.msra.mxu0 0.0
    %1081 = vmatprep.subr.mxu0 0.0
    %1082 = vmatpush2.msra.mxu0 0.0
    %1083 = vmatprep.subr.mxu0 0.0
    %1084 = vmatpush2.msra.mxu0 0.0
    %1085 = vmatprep.subr.mxu0 0.0
    %1086 = vmatpush2.msra.mxu0 0.0
    %1087 = vmatprep.subr.mxu0 0.0
    %1088 = vmatpush2.msra.mxu0 0.0
    %1089 = vmatprep.subr.mxu0 0.0
    %1090 = vmatpush2.msra.mxu0 0.0
    %1091 = vmatprep.subr.mxu0 0.0
    %1092 = vmatpush2.msra.mxu0 0.0
    %1093 = vmatprep.subr.mxu0 0.0
    %1094 = vmatpush2.msra.mxu0 0.0
    %1095 = vmatprep.subr.mxu0 0.0
    %1096 = vmatpush2.msra.mxu0 0.0
    %1097 = vmatprep.subr.mxu0 0.0
    %1098 = vmatpush2.msra.mxu0 0.0
    %1099 = vmatprep.subr.mxu0 0.0
    %1100 = vmatpush2.msra.mxu0 0.0
    %1101 = vmatprep.mubr.f32.mxu0 0.0
    %v1102 = vand.u32 %v1034, 4294901760
    %v1103 = vsub.f32 %v1034, %v1102
    %v1104 = vand.u32 %v1103, 4294901760
    %v1105 = vsub.f32 %v1103, %v1104
    %v1106 = vand.u32 %v1105, 4294901760
    %1107 = vmatmul.mubr.f32.gmra.mxu0 %v1106
    %v1108 = vpop.f32.mrf.mxu0
    %v1109 = vadd.f32 0.0, %v1108
    %v1110 = vpop.f32.mrf.mxu0
    %1111 = vdwg.mxu0
    %1112 = vmatprep.subr.mxu0 0.0
    %1113 = vmatpush1.msra.mxu0 0.0
    %1114 = vmatprep.subr.mxu0 0.0
    %1115 = vmatpush1.msra.mxu0 0.0
    %1116 = vmatprep.subr.mxu0 0.0
    %1117 = vmatpush1.msra.mxu0 0.0
    %1118 = vmatprep.subr.mxu0 0.0
    %1119 = vmatpush1.msra.mxu0 0.0
    %1120 = vmatprep.subr.mxu0 0.0
    %1121 = vmatpush1.msra.mxu0 0.0
    %1122 = vmatprep.subr.mxu0 0.0
    %1123 = vmatpush1.msra.mxu0 0.0
    %1124 = vmatprep.subr.mxu0 0.0
    %1125 = vmatpush1.msra.mxu0 0.0
    %1126 = vmatprep.subr.mxu0 0.0
    %1127 = vmatpush1.msra.mxu0 0.0
    %1128 = vmatprep.subr.mxu0 0.0
    %1129 = vmatpush1.msra.mxu0 0.0
    %1130 = vmatprep.subr.mxu0 0.0
    %1131 = vmatpush1.msra.mxu0 0.0
    %1132 = vmatprep.subr.mxu0 0.0
    %1133 = vmatpush1.msra.mxu0 0.0
    %1134 = vmatprep.subr.mxu0 0.0
    %1135 = vmatpush1.msra.mxu0 0.0
    %1136 = vmatprep.subr.mxu0 0.0
    %1137 = vmatpush1.msra.mxu0 0.0
    %1138 = vmatprep.subr.mxu0 0.0
    %1139 = vmatpush1.msra.mxu0 0.0
    %1140 = vmatprep.subr.mxu0 0.0
    %1141 = vmatpush1.msra.mxu0 0.0
    %1142 = vmatprep.subr.mxu0 0.0
    %v1143 = vand.u32 %v34, 4294901760
    %v1144 = vsub.f32 %v34, %v1143
    %v1145 = vand.u32 %v1144, 4294901760
    %v1146 = vsub.f32 %v1144, %v1145
    %v1147 = vand.u32 %v1146, 4294901760
    %1148 = vmatpush1.msra.mxu0 %v1147
    %1149 = vmatprep.subr.mxu0 0.0
    %1150 = vmatpush2.msra.mxu0 0.0
    %1151 = vmatprep.subr.mxu0 0.0
    %1152 = vmatpush2.msra.mxu0 0.0
    %1153 = vmatprep.subr.mxu0 0.0
    %1154 = vmatpush2.msra.mxu0 0.0
    %1155 = vmatprep.subr.mxu0 0.0
    %1156 = vmatpush2.msra.mxu0 0.0
    %1157 = vmatprep.subr.mxu0 0.0
    %1158 = vmatpush2.msra.mxu0 0.0
    %1159 = vmatprep.subr.mxu0 0.0
    %1160 = vmatpush2.msra.mxu0 0.0
    %1161 = vmatprep.subr.mxu0 0.0
    %1162 = vmatpush2.msra.mxu0 0.0
    %1163 = vmatprep.subr.mxu0 0.0
    %1164 = vmatpush2.msra.mxu0 0.0
    %1165 = vmatprep.subr.mxu0 0.0
    %1166 = vmatpush2.msra.mxu0 0.0
    %1167 = vmatprep.subr.mxu0 0.0
    %1168 = vmatpush2.msra.mxu0 0.0
    %1169 = vmatprep.subr.mxu0 0.0
    %1170 = vmatpush2.msra.mxu0 0.0
    %1171 = vmatprep.subr.mxu0 0.0
    %1172 = vmatpush2.msra.mxu0 0.0
    %1173 = vmatprep.subr.mxu0 0.0
    %1174 = vmatpush2.msra.mxu0 0.0
    %1175 = vmatprep.subr.mxu0 0.0
    %1176 = vmatpush2.msra.mxu0 0.0
    %1177 = vmatprep.subr.mxu0 0.0
    %1178 = vmatpush2.msra.mxu0 0.0
    %1179 = vmatprep.subr.mxu0 0.0
    %1180 = vmatpush2.msra.mxu0 0.0
    %1181 = vmatprep.mubr.f32.mxu0 0.0
    %v1182 = vand.u32 %v1034, 4294901760
    %1183 = vmatmul.mubr.f32.gmra.mxu0 %v1182
    %v1184 = vpop.f32.mrf.mxu0
    %v1185 = vadd.f32 %v1109, %v1184
    %v1186 = vpop.f32.mrf.mxu0
    %1187 = vdwg.mxu0
    %1188 = vmatprep.subr.mxu0 0.0
    %1189 = vmatpush1.msra.mxu0 0.0
    %1190 = vmatprep.subr.mxu0 0.0
    %1191 = vmatpush1.msra.mxu0 0.0
    %1192 = vmatprep.subr.mxu0 0.0
    %1193 = vmatpush1.msra.mxu0 0.0
    %1194 = vmatprep.subr.mxu0 0.0
    %1195 = vmatpush1.msra.mxu0 0.0
    %1196 = vmatprep.subr.mxu0 0.0
    %1197 = vmatpush1.msra.mxu0 0.0
    %1198 = vmatprep.subr.mxu0 0.0
    %1199 = vmatpush1.msra.mxu0 0.0
    %1200 = vmatprep.subr.mxu0 0.0
    %1201 = vmatpush1.msra.mxu0 0.0
    %1202 = vmatprep.subr.mxu0 0.0
    %1203 = vmatpush1.msra.mxu0 0.0
    %1204 = vmatprep.subr.mxu0 0.0
    %1205 = vmatpush1.msra.mxu0 0.0
    %1206 = vmatprep.subr.mxu0 0.0
    %1207 = vmatpush1.msra.mxu0 0.0
    %1208 = vmatprep.subr.mxu0 0.0
    %1209 = vmatpush1.msra.mxu0 0.0
    %1210 = vmatprep.subr.mxu0 0.0
    %1211 = vmatpush1.msra.mxu0 0.0
    %1212 = vmatprep.subr.mxu0 0.0
    %1213 = vmatpush1.msra.mxu0 0.0
    %1214 = vmatprep.subr.mxu0 0.0
    %1215 = vmatpush1.msra.mxu0 0.0
    %1216 = vmatprep.subr.mxu0 0.0
    %1217 = vmatpush1.msra.mxu0 0.0
    %1218 = vmatprep.subr.mxu0 0.0
    %v1219 = vand.u32 %v34, 4294901760
    %v1220 = vsub.f32 %v34, %v1219
    %1221 = vmatpush1.msra.mxu0 %v1220
    %1222 = vmatprep.subr.mxu0 0.0
    %1223 = vmatpush2.msra.mxu0 0.0
    %1224 = vmatprep.subr.mxu0 0.0
    %1225 = vmatpush2.msra.mxu0 0.0
    %1226 = vmatprep.subr.mxu0 0.0
    %1227 = vmatpush2.msra.mxu0 0.0
    %1228 = vmatprep.subr.mxu0 0.0
    %1229 = vmatpush2.msra.mxu0 0.0
    %1230 = vmatprep.subr.mxu0 0.0
    %1231 = vmatpush2.msra.mxu0 0.0
    %1232 = vmatprep.subr.mxu0 0.0
    %1233 = vmatpush2.msra.mxu0 0.0
    %1234 = vmatprep.subr.mxu0 0.0
    %1235 = vmatpush2.msra.mxu0 0.0
    %1236 = vmatprep.subr.mxu0 0.0
    %1237 = vmatpush2.msra.mxu0 0.0
    %1238 = vmatprep.subr.mxu0 0.0
    %1239 = vmatpush2.msra.mxu0 0.0
    %1240 = vmatprep.subr.mxu0 0.0
    %1241 = vmatpush2.msra.mxu0 0.0
    %1242 = vmatprep.subr.mxu0 0.0
    %1243 = vmatpush2.msra.mxu0 0.0
    %1244 = vmatprep.subr.mxu0 0.0
    %1245 = vmatpush2.msra.mxu0 0.0
    %1246 = vmatprep.subr.mxu0 0.0
    %1247 = vmatpush2.msra.mxu0 0.0
    %1248 = vmatprep.subr.mxu0 0.0
    %1249 = vmatpush2.msra.mxu0 0.0
    %1250 = vmatprep.subr.mxu0 0.0
    %1251 = vmatpush2.msra.mxu0 0.0
    %1252 = vmatprep.subr.mxu0 0.0
    %1253 = vmatpush2.msra.mxu0 0.0
    %1254 = vmatprep.mubr.f32.mxu0 0.0
    %v1255 = vand.u32 %v1034, 4294901760
    %v1256 = vsub.f32 %v1034, %v1255
    %1257 = vmatmul.mubr.f32.gmra.mxu0 %v1256
    %v1258 = vpop.f32.mrf.mxu0
    %v1259 = vadd.f32 %v1185, %v1258
    %v1260 = vpop.f32.mrf.mxu0
    %1261 = vdwg.mxu0
    %1262 = vmatprep.subr.mxu0 0.0
    %1263 = vmatpush1.msra.mxu0 0.0
    %1264 = vmatprep.subr.mxu0 0.0
    %1265 = vmatpush1.msra.mxu0 0.0
    %1266 = vmatprep.subr.mxu0 0.0
    %1267 = vmatpush1.msra.mxu0 0.0
    %1268 = vmatprep.subr.mxu0 0.0
    %1269 = vmatpush1.msra.mxu0 0.0
    %1270 = vmatprep.subr.mxu0 0.0
    %1271 = vmatpush1.msra.mxu0 0.0
    %1272 = vmatprep.subr.mxu0 0.0
    %1273 = vmatpush1.msra.mxu0 0.0
    %1274 = vmatprep.subr.mxu0 0.0
    %1275 = vmatpush1.msra.mxu0 0.0
    %1276 = vmatprep.subr.mxu0 0.0
    %1277 = vmatpush1.msra.mxu0 0.0
    %1278 = vmatprep.subr.mxu0 0.0
    %1279 = vmatpush1.msra.mxu0 0.0
    %1280 = vmatprep.subr.mxu0 0.0
    %1281 = vmatpush1.msra.mxu0 0.0
    %1282 = vmatprep.subr.mxu0 0.0
    %1283 = vmatpush1.msra.mxu0 0.0
    %1284 = vmatprep.subr.mxu0 0.0
    %1285 = vmatpush1.msra.mxu0 0.0
    %1286 = vmatprep.subr.mxu0 0.0
    %1287 = vmatpush1.msra.mxu0 0.0
    %1288 = vmatprep.subr.mxu0 0.0
    %1289 = vmatpush1.msra.mxu0 0.0
    %1290 = vmatprep.subr.mxu0 0.0
    %1291 = vmatpush1.msra.mxu0 0.0
    %1292 = vmatprep.subr.mxu0 0.0
    %v1293 = vand.u32 %v34, 4294901760
    %1294 = vmatpush1.msra.mxu0 %v1293
    %1295 = vmatprep.subr.mxu0 0.0
    %1296 = vmatpush2.msra.mxu0 0.0
    %1297 = vmatprep.subr.mxu0 0.0
    %1298 = vmatpush2.msra.mxu0 0.0
    %1299 = vmatprep.subr.mxu0 0.0
    %1300 = vmatpush2.msra.mxu0 0.0
    %1301 = vmatprep.subr.mxu0 0.0
    %1302 = vmatpush2.msra.mxu0 0.0
    %1303 = vmatprep.subr.mxu0 0.0
    %1304 = vmatpush2.msra.mxu0 0.0
    %1305 = vmatprep.subr.mxu0 0.0
    %1306 = vmatpush2.msra.mxu0 0.0
    %1307 = vmatprep.subr.mxu0 0.0
    %1308 = vmatpush2.msra.mxu0 0.0
    %1309 = vmatprep.subr.mxu0 0.0
    %1310 = vmatpush2.msra.mxu0 0.0
    %1311 = vmatprep.subr.mxu0 0.0
    %1312 = vmatpush2.msra.mxu0 0.0
    %1313 = vmatprep.subr.mxu0 0.0
    %1314 = vmatpush2.msra.mxu0 0.0
    %1315 = vmatprep.subr.mxu0 0.0
    %1316 = vmatpush2.msra.mxu0 0.0
    %1317 = vmatprep.subr.mxu0 0.0
    %1318 = vmatpush2.msra.mxu0 0.0
    %1319 = vmatprep.subr.mxu0 0.0
    %1320 = vmatpush2.msra.mxu0 0.0
    %1321 = vmatprep.subr.mxu0 0.0
    %1322 = vmatpush2.msra.mxu0 0.0
    %1323 = vmatprep.subr.mxu0 0.0
    %1324 = vmatpush2.msra.mxu0 0.0
    %1325 = vmatprep.subr.mxu0 0.0
    %1326 = vmatpush2.msra.mxu0 0.0
    %1327 = vmatprep.mubr.f32.mxu0 0.0
    %v1328 = vand.u32 %v1034, 4294901760
    %v1329 = vsub.f32 %v1034, %v1328
    %v1330 = vand.u32 %v1329, 4294901760
    %1331 = vmatmul.mubr.f32.gmra.mxu0 %v1330
    %v1332 = vpop.f32.mrf.mxu0
    %v1333 = vadd.f32 %v1259, %v1332
    %v1334 = vpop.f32.mrf.mxu0
    %1335 = vdwg.mxu0
    %1336 = vmatprep.subr.mxu0 0.0
    %1337 = vmatpush1.msra.mxu0 0.0
    %1338 = vmatprep.subr.mxu0 0.0
    %1339 = vmatpush1.msra.mxu0 0.0
    %1340 = vmatprep.subr.mxu0 0.0
    %1341 = vmatpush1.msra.mxu0 0.0
    %1342 = vmatprep.subr.mxu0 0.0
    %1343 = vmatpush1.msra.mxu0 0.0
    %1344 = vmatprep.subr.mxu0 0.0
    %1345 = vmatpush1.msra.mxu0 0.0
    %1346 = vmatprep.subr.mxu0 0.0
    %1347 = vmatpush1.msra.mxu0 0.0
    %1348 = vmatprep.subr.mxu0 0.0
    %1349 = vmatpush1.msra.mxu0 0.0
    %1350 = vmatprep.subr.mxu0 0.0
    %1351 = vmatpush1.msra.mxu0 0.0
    %1352 = vmatprep.subr.mxu0 0.0
    %1353 = vmatpush1.msra.mxu0 0.0
    %1354 = vmatprep.subr.mxu0 0.0
    %1355 = vmatpush1.msra.mxu0 0.0
    %1356 = vmatprep.subr.mxu0 0.0
    %1357 = vmatpush1.msra.mxu0 0.0
    %1358 = vmatprep.subr.mxu0 0.0
    %1359 = vmatpush1.msra.mxu0 0.0
    %1360 = vmatprep.subr.mxu0 0.0
    %1361 = vmatpush1.msra.mxu0 0.0
    %1362 = vmatprep.subr.mxu0 0.0
    %1363 = vmatpush1.msra.mxu0 0.0
    %1364 = vmatprep.subr.mxu0 0.0
    %1365 = vmatpush1.msra.mxu0 0.0
    %1366 = vmatprep.subr.mxu0 0.0
    %v1367 = vand.u32 %v34, 4294901760
    %v1368 = vsub.f32 %v34, %v1367
    %v1369 = vand.u32 %v1368, 4294901760
    %1370 = vmatpush1.msra.mxu0 %v1369
    %1371 = vmatprep.subr.mxu0 0.0
    %1372 = vmatpush2.msra.mxu0 0.0
    %1373 = vmatprep.subr.mxu0 0.0
    %1374 = vmatpush2.msra.mxu0 0.0
    %1375 = vmatprep.subr.mxu0 0.0
    %1376 = vmatpush2.msra.mxu0 0.0
    %1377 = vmatprep.subr.mxu0 0.0
    %1378 = vmatpush2.msra.mxu0 0.0
    %1379 = vmatprep.subr.mxu0 0.0
    %1380 = vmatpush2.msra.mxu0 0.0
    %1381 = vmatprep.subr.mxu0 0.0
    %1382 = vmatpush2.msra.mxu0 0.0
    %1383 = vmatprep.subr.mxu0 0.0
    %1384 = vmatpush2.msra.mxu0 0.0
    %1385 = vmatprep.subr.mxu0 0.0
    %1386 = vmatpush2.msra.mxu0 0.0
    %1387 = vmatprep.subr.mxu0 0.0
    %1388 = vmatpush2.msra.mxu0 0.0
    %1389 = vmatprep.subr.mxu0 0.0
    %1390 = vmatpush2.msra.mxu0 0.0
    %1391 = vmatprep.subr.mxu0 0.0
    %1392 = vmatpush2.msra.mxu0 0.0
    %1393 = vmatprep.subr.mxu0 0.0
    %1394 = vmatpush2.msra.mxu0 0.0
    %1395 = vmatprep.subr.mxu0 0.0
    %1396 = vmatpush2.msra.mxu0 0.0
    %1397 = vmatprep.subr.mxu0 0.0
    %1398 = vmatpush2.msra.mxu0 0.0
    %1399 = vmatprep.subr.mxu0 0.0
    %1400 = vmatpush2.msra.mxu0 0.0
    %1401 = vmatprep.subr.mxu0 0.0
    %1402 = vmatpush2.msra.mxu0 0.0
    %1403 = vmatprep.mubr.f32.mxu0 0.0
    %v1404 = vand.u32 %v1034, 4294901760
    %1405 = vmatmul.mubr.f32.gmra.mxu0 %v1404
    %v1406 = vpop.f32.mrf.mxu0
    %v1407 = vadd.f32 %v1333, %v1406
    %v1408 = vpop.f32.mrf.mxu0
    %1409 = vdwg.mxu0
    %1410 = vmatprep.subr.mxu0 0.0
    %1411 = vmatpush1.msra.mxu0 0.0
    %1412 = vmatprep.subr.mxu0 0.0
    %1413 = vmatpush1.msra.mxu0 0.0
    %1414 = vmatprep.subr.mxu0 0.0
    %1415 = vmatpush1.msra.mxu0 0.0
    %1416 = vmatprep.subr.mxu0 0.0
    %1417 = vmatpush1.msra.mxu0 0.0
    %1418 = vmatprep.subr.mxu0 0.0
    %1419 = vmatpush1.msra.mxu0 0.0
    %1420 = vmatprep.subr.mxu0 0.0
    %1421 = vmatpush1.msra.mxu0 0.0
    %1422 = vmatprep.subr.mxu0 0.0
    %1423 = vmatpush1.msra.mxu0 0.0
    %1424 = vmatprep.subr.mxu0 0.0
    %1425 = vmatpush1.msra.mxu0 0.0
    %1426 = vmatprep.subr.mxu0 0.0
    %1427 = vmatpush1.msra.mxu0 0.0
    %1428 = vmatprep.subr.mxu0 0.0
    %1429 = vmatpush1.msra.mxu0 0.0
    %1430 = vmatprep.subr.mxu0 0.0
    %1431 = vmatpush1.msra.mxu0 0.0
    %1432 = vmatprep.subr.mxu0 0.0
    %1433 = vmatpush1.msra.mxu0 0.0
    %1434 = vmatprep.subr.mxu0 0.0
    %1435 = vmatpush1.msra.mxu0 0.0
    %1436 = vmatprep.subr.mxu0 0.0
    %1437 = vmatpush1.msra.mxu0 0.0
    %1438 = vmatprep.subr.mxu0 0.0
    %1439 = vmatpush1.msra.mxu0 0.0
    %1440 = vmatprep.subr.mxu0 0.0
    %v1441 = vand.u32 %v34, 4294901760
    %1442 = vmatpush1.msra.mxu0 %v1441
    %1443 = vmatprep.subr.mxu0 0.0
    %1444 = vmatpush2.msra.mxu0 0.0
    %1445 = vmatprep.subr.mxu0 0.0
    %1446 = vmatpush2.msra.mxu0 0.0
    %1447 = vmatprep.subr.mxu0 0.0
    %1448 = vmatpush2.msra.mxu0 0.0
    %1449 = vmatprep.subr.mxu0 0.0
    %1450 = vmatpush2.msra.mxu0 0.0
    %1451 = vmatprep.subr.mxu0 0.0
    %1452 = vmatpush2.msra.mxu0 0.0
    %1453 = vmatprep.subr.mxu0 0.0
    %1454 = vmatpush2.msra.mxu0 0.0
    %1455 = vmatprep.subr.mxu0 0.0
    %1456 = vmatpush2.msra.mxu0 0.0
    %1457 = vmatprep.subr.mxu0 0.0
    %1458 = vmatpush2.msra.mxu0 0.0
    %1459 = vmatprep.subr.mxu0 0.0
    %1460 = vmatpush2.msra.mxu0 0.0
    %1461 = vmatprep.subr.mxu0 0.0
    %1462 = vmatpush2.msra.mxu0 0.0
    %1463 = vmatprep.subr.mxu0 0.0
    %1464 = vmatpush2.msra.mxu0 0.0
    %1465 = vmatprep.subr.mxu0 0.0
    %1466 = vmatpush2.msra.mxu0 0.0
    %1467 = vmatprep.subr.mxu0 0.0
    %1468 = vmatpush2.msra.mxu0 0.0
    %1469 = vmatprep.subr.mxu0 0.0
    %1470 = vmatpush2.msra.mxu0 0.0
    %1471 = vmatprep.subr.mxu0 0.0
    %1472 = vmatpush2.msra.mxu0 0.0
    %1473 = vmatprep.subr.mxu0 0.0
    %1474 = vmatpush2.msra.mxu0 0.0
    %1475 = vmatprep.mubr.f32.mxu0 0.0
    %v1476 = vand.u32 %v1034, 4294901760
    %1477 = vmatmul.mubr.f32.gmra.mxu0 %v1476
    %v1478 = vpop.f32.mrf.mxu0
    %v1479 = vadd.f32 %v1407, %v1478
    %v1480 = vpop.f32.mrf.mxu0
    %1481 = vdwg.mxu0
    %v1482 = vmul.f32 %v529, %v529
    %1483 = vadd.xlane.f32.xlu0 %v1482
    %v1484 = vpop.xlane.xlu0 %1483
    %v1485 = vmax.f32 %v1484, 1e-24
    %v1486 = vrsqrt.pop %v1485
    %v1487 = vmul.f32 %v529, %v1486
    %v1488 = vmul.f32 %v1479, %v1479
    %1489 = vadd.xlane.f32.xlu0 %v1488
    %v1490 = vpop.xlane.xlu0 %1489
    %v1491 = vmax.f32 %v1490, 1e-24
    %v1492 = vrsqrt.pop %v1491
    %v1493 = vmul.f32 %v1479, %v1492
    %v1494 = vadd.f32 %v1487, %v1493
    %v1495 = vmul.f32 %v1023, %v1023
    %1496 = vadd.xlane.f32.xlu0 %v1495
    %v1497 = vpop.xlane.xlu0 %1496
    %v1498 = vmax.f32 %v1497, 1e-24
    %v1499 = vrsqrt.pop %v1498
    %v1500 = vmul.f32 %v1023, %v1499
    %v1501 = vsub.f32 %v1494, %v1500
    %v1502 = vmul.f32 %v1501, %v1501
    %1503 = vmatprep.subr.mxu0 0.0
    %1504 = vmatpush1.xpose.msra.mxu0 0.0
    %1505 = vmatprep.subr.mxu0 0.0
    %1506 = vmatpush1.xpose.msra.mxu0 0.0
    %1507 = vmatprep.subr.mxu0 0.0
    %1508 = vmatpush1.xpose.msra.mxu0 0.0
    %1509 = vmatprep.subr.mxu0 0.0
    %1510 = vmatpush1.xpose.msra.mxu0 0.0
    %1511 = vmatprep.subr.mxu0 0.0
    %1512 = vmatpush1.xpose.msra.mxu0 0.0
    %1513 = vmatprep.subr.mxu0 0.0
    %1514 = vmatpush1.xpose.msra.mxu0 0.0
    %1515 = vmatprep.subr.mxu0 0.0
    %1516 = vmatpush1.xpose.msra.mxu0 0.0
    %1517 = vmatprep.subr.mxu0 0.0
    %1518 = vmatpush1.xpose.msra.mxu0 0.0
    %1519 = vmatprep.subr.mxu0 0.0
    %1520 = vmatpush1.xpose.msra.mxu0 0.0
    %1521 = vmatprep.subr.mxu0 0.0
    %1522 = vmatpush1.xpose.msra.mxu0 0.0
    %1523 = vmatprep.subr.mxu0 0.0
    %1524 = vmatpush1.xpose.msra.mxu0 0.0
    %1525 = vmatprep.subr.mxu0 0.0
    %1526 = vmatpush1.xpose.msra.mxu0 0.0
    %1527 = vmatprep.subr.mxu0 0.0
    %1528 = vmatpush1.xpose.msra.mxu0 0.0
    %1529 = vmatprep.subr.mxu0 0.0
    %1530 = vmatpush1.xpose.msra.mxu0 0.0
    %1531 = vmatprep.subr.mxu0 0.0
    %1532 = vmatpush1.xpose.msra.mxu0 0.0
    %1533 = vmatprep.subr.mxu0 0.0
    %v1534 = vand.u32 %v1502, 4294901760
    %1535 = vmatpush1.xpose.msra.mxu0 %v1534
    %1536 = vmatprep.subr.mxu0 0.0
    %1537 = vmatpush2.xpose.msra.mxu0 0.0
    %1538 = vmatprep.subr.mxu0 0.0
    %1539 = vmatpush2.xpose.msra.mxu0 0.0
    %1540 = vmatprep.subr.mxu0 0.0
    %1541 = vmatpush2.xpose.msra.mxu0 0.0
    %1542 = vmatprep.subr.mxu0 0.0
    %1543 = vmatpush2.xpose.msra.mxu0 0.0
    %1544 = vmatprep.subr.mxu0 0.0
    %1545 = vmatpush2.xpose.msra.mxu0 0.0
    %1546 = vmatprep.subr.mxu0 0.0
    %1547 = vmatpush2.xpose.msra.mxu0 0.0
    %1548 = vmatprep.subr.mxu0 0.0
    %1549 = vmatpush2.xpose.msra.mxu0 0.0
    %1550 = vmatprep.subr.mxu0 0.0
    %1551 = vmatpush2.xpose.msra.mxu0 0.0
    %1552 = vmatprep.subr.mxu0 0.0
    %1553 = vmatpush2.xpose.msra.mxu0 0.0
    %1554 = vmatprep.subr.mxu0 0.0
    %1555 = vmatpush2.xpose.msra.mxu0 0.0
    %1556 = vmatprep.subr.mxu0 0.0
    %1557 = vmatpush2.xpose.msra.mxu0 0.0
    %1558 = vmatprep.subr.mxu0 0.0
    %1559 = vmatpush2.xpose.msra.mxu0 0.0
    %1560 = vmatprep.subr.mxu0 0.0
    %1561 = vmatpush2.xpose.msra.mxu0 0.0
    %1562 = vmatprep.subr.mxu0 0.0
    %1563 = vmatpush2.xpose.msra.mxu0 0.0
    %1564 = vmatprep.subr.mxu0 0.0
    %1565 = vmatpush2.xpose.msra.mxu0 0.0
    %1566 = vmatprep.subr.mxu0 0.0
    %1567 = vmatpush2.xpose.msra.mxu0 0.0
    %1568 = vmatprep.mubr.f32.mxu0 0.0
    %1569 = vmatmul.mubr.f32.gmra.mxu0 0.0
    %v1570 = vpop.f32.mrf.mxu0
    %v1571 = vadd.f32 0.0, %v1570
    %v1572 = vpop.f32.mrf.mxu0
    %1573 = vdwg.mxu0
    %1574 = vmatprep.subr.mxu0 0.0
    %1575 = vmatpush1.xpose.msra.mxu0 0.0
    %1576 = vmatprep.subr.mxu0 0.0
    %1577 = vmatpush1.xpose.msra.mxu0 0.0
    %1578 = vmatprep.subr.mxu0 0.0
    %1579 = vmatpush1.xpose.msra.mxu0 0.0
    %1580 = vmatprep.subr.mxu0 0.0
    %1581 = vmatpush1.xpose.msra.mxu0 0.0
    %1582 = vmatprep.subr.mxu0 0.0
    %1583 = vmatpush1.xpose.msra.mxu0 0.0
    %1584 = vmatprep.subr.mxu0 0.0
    %1585 = vmatpush1.xpose.msra.mxu0 0.0
    %1586 = vmatprep.subr.mxu0 0.0
    %1587 = vmatpush1.xpose.msra.mxu0 0.0
    %1588 = vmatprep.subr.mxu0 0.0
    %1589 = vmatpush1.xpose.msra.mxu0 0.0
    %1590 = vmatprep.subr.mxu0 0.0
    %1591 = vmatpush1.xpose.msra.mxu0 0.0
    %1592 = vmatprep.subr.mxu0 0.0
    %1593 = vmatpush1.xpose.msra.mxu0 0.0
    %1594 = vmatprep.subr.mxu0 0.0
    %1595 = vmatpush1.xpose.msra.mxu0 0.0
    %1596 = vmatprep.subr.mxu0 0.0
    %1597 = vmatpush1.xpose.msra.mxu0 0.0
    %1598 = vmatprep.subr.mxu0 0.0
    %1599 = vmatpush1.xpose.msra.mxu0 0.0
    %1600 = vmatprep.subr.mxu0 0.0
    %1601 = vmatpush1.xpose.msra.mxu0 0.0
    %1602 = vmatprep.subr.mxu0 0.0
    %1603 = vmatpush1.xpose.msra.mxu0 0.0
    %1604 = vmatprep.subr.mxu0 0.0
    %v1605 = vand.u32 %v1502, 4294901760
    %v1606 = vsub.f32 %v1502, %v1605
    %v1607 = vand.u32 %v1606, 4294901760
    %v1608 = vsub.f32 %v1606, %v1607
    %v1609 = vand.u32 %v1608, 4294901760
    %1610 = vmatpush1.xpose.msra.mxu0 %v1609
    %1611 = vmatprep.subr.mxu0 0.0
    %1612 = vmatpush2.xpose.msra.mxu0 0.0
    %1613 = vmatprep.subr.mxu0 0.0
    %1614 = vmatpush2.xpose.msra.mxu0 0.0
    %1615 = vmatprep.subr.mxu0 0.0
    %1616 = vmatpush2.xpose.msra.mxu0 0.0
    %1617 = vmatprep.subr.mxu0 0.0
    %1618 = vmatpush2.xpose.msra.mxu0 0.0
    %1619 = vmatprep.subr.mxu0 0.0
    %1620 = vmatpush2.xpose.msra.mxu0 0.0
    %1621 = vmatprep.subr.mxu0 0.0
    %1622 = vmatpush2.xpose.msra.mxu0 0.0
    %1623 = vmatprep.subr.mxu0 0.0
    %1624 = vmatpush2.xpose.msra.mxu0 0.0
    %1625 = vmatprep.subr.mxu0 0.0
    %1626 = vmatpush2.xpose.msra.mxu0 0.0
    %1627 = vmatprep.subr.mxu0 0.0
    %1628 = vmatpush2.xpose.msra.mxu0 0.0
    %1629 = vmatprep.subr.mxu0 0.0
    %1630 = vmatpush2.xpose.msra.mxu0 0.0
    %1631 = vmatprep.subr.mxu0 0.0
    %1632 = vmatpush2.xpose.msra.mxu0 0.0
    %1633 = vmatprep.subr.mxu0 0.0
    %1634 = vmatpush2.xpose.msra.mxu0 0.0
    %1635 = vmatprep.subr.mxu0 0.0
    %1636 = vmatpush2.xpose.msra.mxu0 0.0
    %1637 = vmatprep.subr.mxu0 0.0
    %1638 = vmatpush2.xpose.msra.mxu0 0.0
    %1639 = vmatprep.subr.mxu0 0.0
    %1640 = vmatpush2.xpose.msra.mxu0 0.0
    %1641 = vmatprep.subr.mxu0 0.0
    %1642 = vmatpush2.xpose.msra.mxu0 0.0
    %1643 = vmatprep.mubr.f32.mxu0 0.0
    %1644 = vmatmul.mubr.f32.gmra.mxu0 1.0
    %v1645 = vpop.f32.mrf.mxu0
    %v1646 = vadd.f32 %v1571, %v1645
    %v1647 = vpop.f32.mrf.mxu0
    %1648 = vdwg.mxu0
    %1649 = vmatprep.subr.mxu0 0.0
    %1650 = vmatpush1.xpose.msra.mxu0 0.0
    %1651 = vmatprep.subr.mxu0 0.0
    %1652 = vmatpush1.xpose.msra.mxu0 0.0
    %1653 = vmatprep.subr.mxu0 0.0
    %1654 = vmatpush1.xpose.msra.mxu0 0.0
    %1655 = vmatprep.subr.mxu0 0.0
    %1656 = vmatpush1.xpose.msra.mxu0 0.0
    %1657 = vmatprep.subr.mxu0 0.0
    %1658 = vmatpush1.xpose.msra.mxu0 0.0
    %1659 = vmatprep.subr.mxu0 0.0
    %1660 = vmatpush1.xpose.msra.mxu0 0.0
    %1661 = vmatprep.subr.mxu0 0.0
    %1662 = vmatpush1.xpose.msra.mxu0 0.0
    %1663 = vmatprep.subr.mxu0 0.0
    %1664 = vmatpush1.xpose.msra.mxu0 0.0
    %1665 = vmatprep.subr.mxu0 0.0
    %1666 = vmatpush1.xpose.msra.mxu0 0.0
    %1667 = vmatprep.subr.mxu0 0.0
    %1668 = vmatpush1.xpose.msra.mxu0 0.0
    %1669 = vmatprep.subr.mxu0 0.0
    %1670 = vmatpush1.xpose.msra.mxu0 0.0
    %1671 = vmatprep.subr.mxu0 0.0
    %1672 = vmatpush1.xpose.msra.mxu0 0.0
    %1673 = vmatprep.subr.mxu0 0.0
    %1674 = vmatpush1.xpose.msra.mxu0 0.0
    %1675 = vmatprep.subr.mxu0 0.0
    %1676 = vmatpush1.xpose.msra.mxu0 0.0
    %1677 = vmatprep.subr.mxu0 0.0
    %1678 = vmatpush1.xpose.msra.mxu0 0.0
    %1679 = vmatprep.subr.mxu0 0.0
    %v1680 = vand.u32 %v1502, 4294901760
    %v1681 = vsub.f32 %v1502, %v1680
    %1682 = vmatpush1.xpose.msra.mxu0 %v1681
    %1683 = vmatprep.subr.mxu0 0.0
    %1684 = vmatpush2.xpose.msra.mxu0 0.0
    %1685 = vmatprep.subr.mxu0 0.0
    %1686 = vmatpush2.xpose.msra.mxu0 0.0
    %1687 = vmatprep.subr.mxu0 0.0
    %1688 = vmatpush2.xpose.msra.mxu0 0.0
    %1689 = vmatprep.subr.mxu0 0.0
    %1690 = vmatpush2.xpose.msra.mxu0 0.0
    %1691 = vmatprep.subr.mxu0 0.0
    %1692 = vmatpush2.xpose.msra.mxu0 0.0
    %1693 = vmatprep.subr.mxu0 0.0
    %1694 = vmatpush2.xpose.msra.mxu0 0.0
    %1695 = vmatprep.subr.mxu0 0.0
    %1696 = vmatpush2.xpose.msra.mxu0 0.0
    %1697 = vmatprep.subr.mxu0 0.0
    %1698 = vmatpush2.xpose.msra.mxu0 0.0
    %1699 = vmatprep.subr.mxu0 0.0
    %1700 = vmatpush2.xpose.msra.mxu0 0.0
    %1701 = vmatprep.subr.mxu0 0.0
    %1702 = vmatpush2.xpose.msra.mxu0 0.0
    %1703 = vmatprep.subr.mxu0 0.0
    %1704 = vmatpush2.xpose.msra.mxu0 0.0
    %1705 = vmatprep.subr.mxu0 0.0
    %1706 = vmatpush2.xpose.msra.mxu0 0.0
    %1707 = vmatprep.subr.mxu0 0.0
    %1708 = vmatpush2.xpose.msra.mxu0 0.0
    %1709 = vmatprep.subr.mxu0 0.0
    %1710 = vmatpush2.xpose.msra.mxu0 0.0
    %1711 = vmatprep.subr.mxu0 0.0
    %1712 = vmatpush2.xpose.msra.mxu0 0.0
    %1713 = vmatprep.subr.mxu0 0.0
    %1714 = vmatpush2.xpose.msra.mxu0 0.0
    %1715 = vmatprep.mubr.f32.mxu0 0.0
    %1716 = vmatmul.mubr.f32.gmra.mxu0 0.0
    %v1717 = vpop.f32.mrf.mxu0
    %v1718 = vadd.f32 %v1646, %v1717
    %v1719 = vpop.f32.mrf.mxu0
    %1720 = vdwg.mxu0
    %1721 = vmatprep.subr.mxu0 0.0
    %1722 = vmatpush1.xpose.msra.mxu0 0.0
    %1723 = vmatprep.subr.mxu0 0.0
    %1724 = vmatpush1.xpose.msra.mxu0 0.0
    %1725 = vmatprep.subr.mxu0 0.0
    %1726 = vmatpush1.xpose.msra.mxu0 0.0
    %1727 = vmatprep.subr.mxu0 0.0
    %1728 = vmatpush1.xpose.msra.mxu0 0.0
    %1729 = vmatprep.subr.mxu0 0.0
    %1730 = vmatpush1.xpose.msra.mxu0 0.0
    %1731 = vmatprep.subr.mxu0 0.0
    %1732 = vmatpush1.xpose.msra.mxu0 0.0
    %1733 = vmatprep.subr.mxu0 0.0
    %1734 = vmatpush1.xpose.msra.mxu0 0.0
    %1735 = vmatprep.subr.mxu0 0.0
    %1736 = vmatpush1.xpose.msra.mxu0 0.0
    %1737 = vmatprep.subr.mxu0 0.0
    %1738 = vmatpush1.xpose.msra.mxu0 0.0
    %1739 = vmatprep.subr.mxu0 0.0
    %1740 = vmatpush1.xpose.msra.mxu0 0.0
    %1741 = vmatprep.subr.mxu0 0.0
    %1742 = vmatpush1.xpose.msra.mxu0 0.0
    %1743 = vmatprep.subr.mxu0 0.0
    %1744 = vmatpush1.xpose.msra.mxu0 0.0
    %1745 = vmatprep.subr.mxu0 0.0
    %1746 = vmatpush1.xpose.msra.mxu0 0.0
    %1747 = vmatprep.subr.mxu0 0.0
    %1748 = vmatpush1.xpose.msra.mxu0 0.0
    %1749 = vmatprep.subr.mxu0 0.0
    %1750 = vmatpush1.xpose.msra.mxu0 0.0
    %1751 = vmatprep.subr.mxu0 0.0
    %v1752 = vand.u32 %v1502, 4294901760
    %1753 = vmatpush1.xpose.msra.mxu0 %v1752
    %1754 = vmatprep.subr.mxu0 0.0
    %1755 = vmatpush2.xpose.msra.mxu0 0.0
    %1756 = vmatprep.subr.mxu0 0.0
    %1757 = vmatpush2.xpose.msra.mxu0 0.0
    %1758 = vmatprep.subr.mxu0 0.0
    %1759 = vmatpush2.xpose.msra.mxu0 0.0
    %1760 = vmatprep.subr.mxu0 0.0
    %1761 = vmatpush2.xpose.msra.mxu0 0.0
    %1762 = vmatprep.subr.mxu0 0.0
    %1763 = vmatpush2.xpose.msra.mxu0 0.0
    %1764 = vmatprep.subr.mxu0 0.0
    %1765 = vmatpush2.xpose.msra.mxu0 0.0
    %1766 = vmatprep.subr.mxu0 0.0
    %1767 = vmatpush2.xpose.msra.mxu0 0.0
    %1768 = vmatprep.subr.mxu0 0.0
    %1769 = vmatpush2.xpose.msra.mxu0 0.0
    %1770 = vmatprep.subr.mxu0 0.0
    %1771 = vmatpush2.xpose.msra.mxu0 0.0
    %1772 = vmatprep.subr.mxu0 0.0
    %1773 = vmatpush2.xpose.msra.mxu0 0.0
    %1774 = vmatprep.subr.mxu0 0.0
    %1775 = vmatpush2.xpose.msra.mxu0 0.0
    %1776 = vmatprep.subr.mxu0 0.0
    %1777 = vmatpush2.xpose.msra.mxu0 0.0
    %1778 = vmatprep.subr.mxu0 0.0
    %1779 = vmatpush2.xpose.msra.mxu0 0.0
    %1780 = vmatprep.subr.mxu0 0.0
    %1781 = vmatpush2.xpose.msra.mxu0 0.0
    %1782 = vmatprep.subr.mxu0 0.0
    %1783 = vmatpush2.xpose.msra.mxu0 0.0
    %1784 = vmatprep.subr.mxu0 0.0
    %1785 = vmatpush2.xpose.msra.mxu0 0.0
    %1786 = vmatprep.mubr.f32.mxu0 0.0
    %1787 = vmatmul.mubr.f32.gmra.mxu0 0.0
    %v1788 = vpop.f32.mrf.mxu0
    %v1789 = vadd.f32 %v1718, %v1788
    %v1790 = vpop.f32.mrf.mxu0
    %1791 = vdwg.mxu0
    %1792 = vmatprep.subr.mxu0 0.0
    %1793 = vmatpush1.xpose.msra.mxu0 0.0
    %1794 = vmatprep.subr.mxu0 0.0
    %1795 = vmatpush1.xpose.msra.mxu0 0.0
    %1796 = vmatprep.subr.mxu0 0.0
    %1797 = vmatpush1.xpose.msra.mxu0 0.0
    %1798 = vmatprep.subr.mxu0 0.0
    %1799 = vmatpush1.xpose.msra.mxu0 0.0
    %1800 = vmatprep.subr.mxu0 0.0
    %1801 = vmatpush1.xpose.msra.mxu0 0.0
    %1802 = vmatprep.subr.mxu0 0.0
    %1803 = vmatpush1.xpose.msra.mxu0 0.0
    %1804 = vmatprep.subr.mxu0 0.0
    %1805 = vmatpush1.xpose.msra.mxu0 0.0
    %1806 = vmatprep.subr.mxu0 0.0
    %1807 = vmatpush1.xpose.msra.mxu0 0.0
    %1808 = vmatprep.subr.mxu0 0.0
    %1809 = vmatpush1.xpose.msra.mxu0 0.0
    %1810 = vmatprep.subr.mxu0 0.0
    %1811 = vmatpush1.xpose.msra.mxu0 0.0
    %1812 = vmatprep.subr.mxu0 0.0
    %1813 = vmatpush1.xpose.msra.mxu0 0.0
    %1814 = vmatprep.subr.mxu0 0.0
    %1815 = vmatpush1.xpose.msra.mxu0 0.0
    %1816 = vmatprep.subr.mxu0 0.0
    %1817 = vmatpush1.xpose.msra.mxu0 0.0
    %1818 = vmatprep.subr.mxu0 0.0
    %1819 = vmatpush1.xpose.msra.mxu0 0.0
    %1820 = vmatprep.subr.mxu0 0.0
    %1821 = vmatpush1.xpose.msra.mxu0 0.0
    %1822 = vmatprep.subr.mxu0 0.0
    %v1823 = vand.u32 %v1502, 4294901760
    %v1824 = vsub.f32 %v1502, %v1823
    %v1825 = vand.u32 %v1824, 4294901760
    %1826 = vmatpush1.xpose.msra.mxu0 %v1825
    %1827 = vmatprep.subr.mxu0 0.0
    %1828 = vmatpush2.xpose.msra.mxu0 0.0
    %1829 = vmatprep.subr.mxu0 0.0
    %1830 = vmatpush2.xpose.msra.mxu0 0.0
    %1831 = vmatprep.subr.mxu0 0.0
    %1832 = vmatpush2.xpose.msra.mxu0 0.0
    %1833 = vmatprep.subr.mxu0 0.0
    %1834 = vmatpush2.xpose.msra.mxu0 0.0
    %1835 = vmatprep.subr.mxu0 0.0
    %1836 = vmatpush2.xpose.msra.mxu0 0.0
    %1837 = vmatprep.subr.mxu0 0.0
    %1838 = vmatpush2.xpose.msra.mxu0 0.0
    %1839 = vmatprep.subr.mxu0 0.0
    %1840 = vmatpush2.xpose.msra.mxu0 0.0
    %1841 = vmatprep.subr.mxu0 0.0
    %1842 = vmatpush2.xpose.msra.mxu0 0.0
    %1843 = vmatprep.subr.mxu0 0.0
    %1844 = vmatpush2.xpose.msra.mxu0 0.0
    %1845 = vmatprep.subr.mxu0 0.0
    %1846 = vmatpush2.xpose.msra.mxu0 0.0
    %1847 = vmatprep.subr.mxu0 0.0
    %1848 = vmatpush2.xpose.msra.mxu0 0.0
    %1849 = vmatprep.subr.mxu0 0.0
    %1850 = vmatpush2.xpose.msra.mxu0 0.0
    %1851 = vmatprep.subr.mxu0 0.0
    %1852 = vmatpush2.xpose.msra.mxu0 0.0
    %1853 = vmatprep.subr.mxu0 0.0
    %1854 = vmatpush2.xpose.msra.mxu0 0.0
    %1855 = vmatprep.subr.mxu0 0.0
    %1856 = vmatpush2.xpose.msra.mxu0 0.0
    %1857 = vmatprep.subr.mxu0 0.0
    %1858 = vmatpush2.xpose.msra.mxu0 0.0
    %1859 = vmatprep.mubr.f32.mxu0 0.0
    %1860 = vmatmul.mubr.f32.gmra.mxu0 1.0
    %v1861 = vpop.f32.mrf.mxu0
    %v1862 = vadd.f32 %v1789, %v1861
    %v1863 = vpop.f32.mrf.mxu0
    %1864 = vdwg.mxu0
    %1865 = vmatprep.subr.mxu0 0.0
    %1866 = vmatpush1.xpose.msra.mxu0 0.0
    %1867 = vmatprep.subr.mxu0 0.0
    %1868 = vmatpush1.xpose.msra.mxu0 0.0
    %1869 = vmatprep.subr.mxu0 0.0
    %1870 = vmatpush1.xpose.msra.mxu0 0.0
    %1871 = vmatprep.subr.mxu0 0.0
    %1872 = vmatpush1.xpose.msra.mxu0 0.0
    %1873 = vmatprep.subr.mxu0 0.0
    %1874 = vmatpush1.xpose.msra.mxu0 0.0
    %1875 = vmatprep.subr.mxu0 0.0
    %1876 = vmatpush1.xpose.msra.mxu0 0.0
    %1877 = vmatprep.subr.mxu0 0.0
    %1878 = vmatpush1.xpose.msra.mxu0 0.0
    %1879 = vmatprep.subr.mxu0 0.0
    %1880 = vmatpush1.xpose.msra.mxu0 0.0
    %1881 = vmatprep.subr.mxu0 0.0
    %1882 = vmatpush1.xpose.msra.mxu0 0.0
    %1883 = vmatprep.subr.mxu0 0.0
    %1884 = vmatpush1.xpose.msra.mxu0 0.0
    %1885 = vmatprep.subr.mxu0 0.0
    %1886 = vmatpush1.xpose.msra.mxu0 0.0
    %1887 = vmatprep.subr.mxu0 0.0
    %1888 = vmatpush1.xpose.msra.mxu0 0.0
    %1889 = vmatprep.subr.mxu0 0.0
    %1890 = vmatpush1.xpose.msra.mxu0 0.0
    %1891 = vmatprep.subr.mxu0 0.0
    %1892 = vmatpush1.xpose.msra.mxu0 0.0
    %1893 = vmatprep.subr.mxu0 0.0
    %1894 = vmatpush1.xpose.msra.mxu0 0.0
    %1895 = vmatprep.subr.mxu0 0.0
    %v1896 = vand.u32 %v1502, 4294901760
    %1897 = vmatpush1.xpose.msra.mxu0 %v1896
    %1898 = vmatprep.subr.mxu0 0.0
    %1899 = vmatpush2.xpose.msra.mxu0 0.0
    %1900 = vmatprep.subr.mxu0 0.0
    %1901 = vmatpush2.xpose.msra.mxu0 0.0
    %1902 = vmatprep.subr.mxu0 0.0
    %1903 = vmatpush2.xpose.msra.mxu0 0.0
    %1904 = vmatprep.subr.mxu0 0.0
    %1905 = vmatpush2.xpose.msra.mxu0 0.0
    %1906 = vmatprep.subr.mxu0 0.0
    %1907 = vmatpush2.xpose.msra.mxu0 0.0
    %1908 = vmatprep.subr.mxu0 0.0
    %1909 = vmatpush2.xpose.msra.mxu0 0.0
    %1910 = vmatprep.subr.mxu0 0.0
    %1911 = vmatpush2.xpose.msra.mxu0 0.0
    %1912 = vmatprep.subr.mxu0 0.0
    %1913 = vmatpush2.xpose.msra.mxu0 0.0
    %1914 = vmatprep.subr.mxu0 0.0
    %1915 = vmatpush2.xpose.msra.mxu0 0.0
    %1916 = vmatprep.subr.mxu0 0.0
    %1917 = vmatpush2.xpose.msra.mxu0 0.0
    %1918 = vmatprep.subr.mxu0 0.0
    %1919 = vmatpush2.xpose.msra.mxu0 0.0
    %1920 = vmatprep.subr.mxu0 0.0
    %1921 = vmatpush2.xpose.msra.mxu0 0.0
    %1922 = vmatprep.subr.mxu0 0.0
    %1923 = vmatpush2.xpose.msra.mxu0 0.0
    %1924 = vmatprep.subr.mxu0 0.0
    %1925 = vmatpush2.xpose.msra.mxu0 0.0
    %1926 = vmatprep.subr.mxu0 0.0
    %1927 = vmatpush2.xpose.msra.mxu0 0.0
    %1928 = vmatprep.subr.mxu0 0.0
    %1929 = vmatpush2.xpose.msra.mxu0 0.0
    %1930 = vmatprep.mubr.f32.mxu0 0.0
    %1931 = vmatmul.mubr.f32.gmra.mxu0 1.0
    %v1932 = vpop.f32.mrf.mxu0
    %v1933 = vadd.f32 %v1862, %v1932
    %v1934 = vpop.f32.mrf.mxu0
    %1935 = vdwg.mxu0
    %v1936 = vrsqrt.pop %v1933
    %v1937 = vmul.f32 %v1933, %v1936
    %vm1938 = vcmp.eq.f32.partialorder %v1933, inf
    %v1939 = vsel %vm1938, %v1933, %v1937
    %vm1940 = vcmp.eq.f32.partialorder %v1933, 0.0
    %v1941 = vand.u32 %v1933, 2147483648
    %v1942 = vsel %vm1940, %v1941, %v1939
    %v1943 = vsub.f32 0.0, %v1942
    %vm1944 = vcmask 57344
    %1945 = vst.msk [vmem:[#allocation5] sm:$0x1] %vm1944, %v1943
    // Predicated region
    $region18: #{tpu_custom_call.1} parent=1 // pred_check
      _
    $region19: #{tpu_custom_call.1} parent=1 // pred_check_branch
      %1947 = sbr.rel (0) target = $region21
    $region20: #{tpu_custom_call.1} parent=1 // pred_region
      %s1949 = ssub.s32 16, 16
      %1950 = vsyncadd [#allocation4], %s1949
      %s1952 = sshll.u32 [#allocation5], 4
      %s1953 = int_to_ptr.vmem [resolvable:$true] %s1952
      %1955 = dma.vmem_to_hbm [thread:$0]  %s1953, 16, %s3, [#allocation4]
    $region21: #{tpu_custom_call.1} parent=1 // pred_fallthru
      _
    // Predicated region
    $region22: #{tpu_custom_call.1} parent=1 // pred_check
      _
    $region23: #{tpu_custom_call.1} parent=1 // pred_check_branch
      %1957 = sbr.rel (0) target = $region25
    $region24: #{tpu_custom_call.1} parent=1 // pred_region
      %1958 = dma.done [#allocation4], 16
    $region25: #{tpu_custom_call.1} parent=1 // pred_fallthru
      _
    %1959 = vsyncpa [#allocation3], 1
    %1960 = vsyncpa [#allocation4], 1

</llo_original>
